<compile_context>
chip_gen: v5e
topology: v5e:2x2
jax: 0.10.0
libtpu: 0.0.40
codegen_flags: <defaults>
</compile_context>

<pallas_src>
import math

import jax
import jax.numpy as jnp
from jax import lax
from jax.experimental import pallas as pl
from jax.experimental.pallas import tpu as pltpu


def _finn_rk4_kernel(dtf_ref, params_ref, u0_ref, w1_ref, b1_ref, w2_ref,
                     b2_ref, w3_ref, b3_ref, out_ref, u_state, slab):
    """Runs T RK4 time steps per grid iteration; state carried in VMEM scratch.

    dtf_ref    (SMEM, f32[3, padded_steps])  rows: [dt, dt/2, dt/6] per step
    params_ref (SMEM, f32[8])   [D0, D1, BC00, BC01, s0, s1, 10**p_exp, dx]
    u0_ref     (VMEM, f32[Nx, 2])   initial state (read only at chunk 0)
    w1/b1      (VMEM, f32[1, H])    layer 1 (input dim 1)
    w2/b2      (VMEM, f32[H, H] / f32[1, H])
    w3         (VMEM, f32[1, H])    output layer weights as a row
    b3         (VMEM, f32[1, 1])
    out_ref    (VMEM, f32[T, Nx, 2])  states for this chunk's T steps
    u_state    (VMEM scratch f32[Nx, 2])    current state, persists across chunks
    slab       (VMEM scratch f32[T, Nx, 2]) per-chunk staging buffer
    """
    chunk = pl.program_id(0)
    T = out_ref.shape[0]
    Nx = u_state.shape[0]

    # --- scalars (SMEM), hoisted once per chunk ------------------------------
    D0 = params_ref[0]
    D1 = params_ref[1]
    bc_c = params_ref[2]
    bc_ct = params_ref[3]
    s0 = params_ref[4]
    s1 = params_ref[5]
    p_scale = params_ref[6]          # 10 ** p_exp, precomputed host-side
    dx = params_ref[7]

    @pl.when(chunk == 0)
    def _():
        u_state[...] = u0_ref[...]

    # --- loop invariants, hoisted out of the inner fori_loop -----------------
    w1 = w1_ref[...]
    b1 = b1_ref[...]
    w2 = w2_ref[...]
    b2 = b2_ref[...]
    w3 = w3_ref[...]                 # [1, H]
    b3 = b3_ref[...]                 # [1, 1]
    row = lax.broadcasted_iota(jnp.int32, (Nx, 1), 0)
    lane = lax.broadcasted_iota(jnp.int32, (Nx, 2), 1)
    is_first = row == 0
    is_last = row == Nx - 1

    def flux(u_in):
        c = u_in[:, 0:1]                                        # [Nx, 1] (ct unused)

        # func_nn: Linear(1->H) Tanh, Linear(H->H) Tanh, Linear(H->1) Sigmoid
        h1 = jnp.tanh(c * w1 + b1)                              # [Nx, H]
        h2 = jnp.tanh(
            jnp.dot(h1, w2, preferred_element_type=jnp.float32) + b2)
        # H->1 layer as VPU multiply + lane reduce (no 1-wide MXU matmul).
        o = jax.nn.sigmoid(jnp.sum(h2 * w3, axis=-1, keepdims=True) + b3)
        ret = o * p_scale                                       # [Nx, 1]

        # Neighbor values via XLU sublane rotations; wrapped boundary rows are
        # overwritten by the is_first / is_last masks below.
        c_prev = pltpu.roll(c, shift=1, axis=0)                 # row i <- c[i-1]
        c_next = pltpu.roll(c, shift=Nx - 1, axis=0)            # row i <- c[i+1]

        left_nb_c = jnp.where(is_first, bc_c, c_prev)
        left_nb_ct = jnp.where(is_first, bc_ct, c_prev)
        # Cauchy right BC: at the last row, c_prev == c[-2] and c == c[-1],
        # so D0*dx*(c_prev - c) == D0*dx*(c[-2] - c[-1]) (no reductions needed).
        right_nb = jnp.where(is_last, D0 * dx * (c_prev - c), c_next)

        flux_c = (D0 * ret * (s0 * c + s1 * left_nb_c)
                  + D0 * ret * (s0 * c + s1 * right_nb))        # [Nx, 1]
        flux_ct = (D1 * (s0 * c + s1 * left_nb_ct)
                   + D1 * (s0 * c + s1 * right_nb))             # [Nx, 1]
        return jnp.where(lane == 0, flux_c, flux_ct)            # [Nx, 2]

    def body(i, u):
        step = chunk * T + i
        dt = dtf_ref[0, step]
        dt_half = dtf_ref[1, step]       # host-precomputed dt/2
        dt_sixth = dtf_ref[2, step]      # host-precomputed dt/6
        k1 = flux(u)
        k2 = flux(u + dt_half * k1)
        k3 = flux(u + dt_half * k2)
        k4 = flux(u + dt * k3)
        u_next = u + dt_sixth * (k1 + 2.0 * k2 + 2.0 * k3 + k4)
        slab[i] = u_next                 # stage into the chunk slab
        return u_next

    u_final = lax.fori_loop(0, T, body, u_state[...], unroll=False)
    u_state[...] = u_final
    out_ref[...] = slab[...]             # ONE chunk-sized store / writeback


class FINNDiffSorpPallas:
    """JAX/Pallas re-implementation of FINN_DiffSorp's forward pass."""

    def __init__(self, Nx, D, BC, dx, layer_sizes, key,
                 p_exp=0.0, stencil=(-1.0, 1.0)):
        assert len(layer_sizes) == 4 and layer_sizes[0] == 1 and layer_sizes[-1] == 1
        self.Nx = Nx
        H = layer_sizes[1]
        assert layer_sizes[2] == H
        self.H = H

        # Deterministic init mimicking nn.Linear (uniform +-1/sqrt(fan_in)).
        k1, k2, k3, k4, k5, k6 = jax.random.split(key, 6)

        def lin(kw, kb, fan_in, fan_out):
            bound = 1.0 / math.sqrt(fan_in)
            w = jax.random.uniform(kw, (fan_in, fan_out), jnp.float32, -bound, bound)
            b = jax.random.uniform(kb, (1, fan_out), jnp.float32, -bound, bound)
            return w, b

        self.w1t, self.b1 = lin(k1, k2, 1, H)    # [1, H], [1, H]
        self.w2t, self.b2 = lin(k3, k4, H, H)    # [H, H], [1, H]
        self.w3t, self.b3 = lin(k5, k6, H, 1)    # [H, 1], [1, 1]
        self.w3_row = jnp.reshape(self.w3t, (1, H))   # [1, H] for lane reduce

        self.D = jnp.asarray(D, jnp.float32)
        self.BC = jnp.asarray(BC, jnp.float32)
        self.dx = float(dx)
        self.p_exp = float(p_exp)
        self.stencil = (float(stencil[0]), float(stencil[1]))
        self.params_vec = jnp.array(
            [float(D[0]), float(D[1]), float(BC[0][0]), float(BC[0][1]),
             self.stencil[0], self.stencil[1], 10.0 ** self.p_exp, self.dx],
            dtype=jnp.float32)

    def forward(self, t, u, chunk_steps=128):
        """Integrates du/dt from u[0] over the time grid t (fixed-step RK4).

        chunk_steps: RK4 steps fused per grid iteration (VMEM staging grows
        ~8 KiB per step at Nx=16; keep it modest if Nx grows, esp. on v7x).
        """
        u0 = u[0].astype(jnp.float32)
        t = jnp.asarray(t, jnp.float32)
        dts = t[1:] - t[:-1]
        num_steps = int(dts.shape[0])
        if num_steps == 0:
            return u0[None]

        T = min(int(chunk_steps), num_steps)
        num_chunks = -(-num_steps // T)          # ceil division
        padded = num_chunks * T
        if padded > num_steps:
            # dt = 0 for padded steps -> u_next == u (no-op); sliced off below.
            dts = jnp.concatenate(
                [dts, jnp.zeros((padded - num_steps,), jnp.float32)])
        dt_facs = jnp.stack([dts, 0.5 * dts, dts / 6.0], axis=0)  # [3, padded]

        Nx, H = self.Nx, self.H
        const = lambda c, *_: (0, 0)   # weights / u0 stay VMEM-resident

        traj = pl.pallas_call(
            _finn_rk4_kernel,
            out_shape=jax.ShapeDtypeStruct((padded, Nx, 2), jnp.float32),
            grid_spec=pltpu.PrefetchScalarGridSpec(
                num_scalar_prefetch=2,            # dt table, params -> SMEM
                grid=(num_chunks,),
                in_specs=[
                    pl.BlockSpec((Nx, 2), const),     # u0
                    pl.BlockSpec((1, H), const),      # w1
                    pl.BlockSpec((1, H), const),      # b1
                    pl.BlockSpec((H, H), const),      # w2
                    pl.BlockSpec((1, H), const),      # b2
                    pl.BlockSpec((1, H), const),      # w3 (row)
                    pl.BlockSpec((1, 1), const),      # b3
                ],
                out_specs=pl.BlockSpec((T, Nx, 2), lambda c, *_: (c, 0, 0)),
                scratch_shapes=[pltpu.VMEM((Nx, 2), jnp.float32),
                                pltpu.VMEM((T, Nx, 2), jnp.float32)],
            ),
            compiler_params=pltpu.CompilerParams(
                dimension_semantics=("arbitrary",)),
        )(dt_facs, self.params_vec, u0, self.w1t, self.b1, self.w2t, self.b2,
          self.w3_row, self.b3)

        return jnp.concatenate([u0[None], traj[:num_steps]], axis=0)


def _flux_reference(model, u):
    """Pure-JAX reference mirroring the PyTorch flux_kernel (for validation)."""
    c = u[:, 0]
    x = c[:, None]
    h1 = jnp.tanh(x @ model.w1t + model.b1)
    h2 = jnp.tanh(jnp.dot(h1, model.w2t, precision=lax.Precision.HIGHEST) + model.b2)
    ret = (jax.nn.sigmoid(
        jnp.dot(h2, model.w3t, precision=lax.Precision.HIGHEST) + model.b3)
        * (10.0 ** model.p_exp))[:, 0]
    D0, D1 = model.D[0], model.D[1]
    s0, s1 = model.stencil
    bc_c, bc_ct = model.BC[0, 0], model.BC[0, 1]

    left_bound_flux_c = (D0 * ret[0] * (s0 * c[0] + s1 * bc_c))[None]
    left_neighbors_c = D0 * ret[1:] * (s0 * c[1:] + s1 * c[:-1])
    left_flux_c = jnp.concatenate([left_bound_flux_c, left_neighbors_c])
    left_bound_flux_ct = (D1 * (s0 * c[0] + s1 * bc_ct))[None]
    left_neighbors_ct = D1 * (s0 * c[1:] + s1 * c[:-1])
    left_flux_ct = jnp.concatenate([left_bound_flux_ct, left_neighbors_ct])

    right_bc = D0 * model.dx * (c[-2] - c[-1])
    right_bound_flux_c = (D0 * ret[-1] * (s0 * c[-1] + s1 * right_bc))[None]
    right_neighbors_c = D0 * ret[:-1] * (s0 * c[:-1] + s1 * c[1:])
    right_flux_c = jnp.concatenate([right_neighbors_c, right_bound_flux_c])
    right_bound_flux_ct = (D1 * (s0 * c[-1] + s1 * right_bc))[None]
    right_neighbors_ct = D1 * (s0 * c[:-1] + s1 * c[1:])
    right_flux_ct = jnp.concatenate([right_neighbors_ct, right_bound_flux_ct])

    return jnp.stack([left_flux_c + right_flux_c,
                      left_flux_ct + right_flux_ct], axis=-1)


def _forward_reference(model, t, u):
    """Pure-JAX fixed-step RK4 using the reference flux (for validation)."""
    u0 = u[0].astype(jnp.float32)

    def step(u_cur, dt):
        k1 = _flux_reference(model, u_cur)
        k2 = _flux_reference(model, u_cur + 0.5 * dt * k1)
        k3 = _flux_reference(model, u_cur + 0.5 * dt * k2)
        k4 = _flux_reference(model, u_cur + dt * k3)
        u_next = u_cur + (dt / 6.0) * (k1 + 2.0 * k2 + 2.0 * k3 + k4)
        return u_next, u_next

    dts = (jnp.asarray(t, jnp.float32)[1:] - jnp.asarray(t, jnp.float32)[:-1])
    _, us = lax.scan(step, u0, dts)
    return jnp.concatenate([u0[None], us], axis=0)


if __name__ == "__main__":
    key = jax.random.PRNGKey(0)
    Nx = 16          # spatial cells
    H = 32           # hidden width of the function learner
    layer_sizes = [1, H, H, 1]

    D = [5.0e-4, 2.5e-4]
    BC = [[1.0, 1.0]]            # Dirichlet value on the left boundary (c, ct)
    dx = 1.0 / Nx

    k_model, k_u = jax.random.split(key)
    model = FINNDiffSorpPallas(Nx, D, BC, dx, layer_sizes, k_model, p_exp=0.0)

    # --- case 1: short trajectory (single chunk) ------------------------------
    num_t = 8
    u = jax.random.uniform(k_u, (num_t, Nx, 2), jnp.float32, 0.0, 1.0)
    t = jnp.linspace(0.0, 1.0, num_t, dtype=jnp.float32)

    pred = jax.block_until_ready(jax.jit(model.forward)(t, u))
    assert pred.shape == (num_t, Nx, 2)
    assert bool(jnp.all(jnp.isfinite(pred)))
    ref = jax.block_until_ready(_forward_reference(model, t, u))
    assert jnp.allclose(pred, ref, rtol=5e-3, atol=1e-5), \
        "Fused Pallas RK4 kernel disagrees with pure-JAX reference (case 1)"

    # --- case 2: longer trajectory exercising multi-chunk carry + padding -----
    num_t2 = 70      # 69 steps -> 3 chunks of 32 steps (padded to 96)
    u2 = jax.random.uniform(k_u, (num_t2, Nx, 2), jnp.float32, 0.0, 1.0)
    t2 = jnp.linspace(0.0, 1.0, num_t2, dtype=jnp.float32)

    fwd32 = jax.jit(lambda tt, uu: model.forward(tt, uu, chunk_steps=32))
    pred2 = jax.block_until_ready(fwd32(t2, u2))
    assert pred2.shape == (num_t2, Nx, 2)
    assert bool(jnp.all(jnp.isfinite(pred2)))
    ref2 = jax.block_until_ready(_forward_reference(model, t2, u2))
    assert jnp.allclose(pred2, ref2, rtol=5e-3, atol=1e-5), \
        "Fused Pallas RK4 kernel disagrees with pure-JAX reference (case 2)"

    print("KERNEL_OK")
</pallas_src>

<mosaic_0001>
module attributes {stable_mosaic.version = 11 : i64} {
  func.func @_finn_rk4_kernel(%arg0: i32, %arg1: memref<3x7xf32, #tpu.memory_space<smem>>, %arg2: memref<8xf32, #tpu.memory_space<smem>>, %arg3: memref<16x2xf32, #tpu.memory_space<vmem>>, %arg4: memref<1x32xf32, #tpu.memory_space<vmem>>, %arg5: memref<1x32xf32, #tpu.memory_space<vmem>>, %arg6: memref<32x32xf32, #tpu.memory_space<vmem>>, %arg7: memref<1x32xf32, #tpu.memory_space<vmem>>, %arg8: memref<1x32xf32, #tpu.memory_space<vmem>>, %arg9: memref<1x1xf32, #tpu.memory_space<vmem>>, %arg10: memref<7x16x2xf32, #tpu.memory_space<vmem>>, %arg11: memref<16x2xf32, #tpu.memory_space<vmem>>, %arg12: memref<7x16x2xf32, #tpu.memory_space<vmem>>) attributes {dimension_semantics = [#tpu.dimension_semantics<arbitrary>], iteration_bounds = array<i64: 1>, scalar_prefetch = 2 : i64, scratch_operands = 2 : i64, tpu.core_type = #tpu.core_type<tc>, window_params = [{pipeline_mode = #tpu.pipeline_mode<synchronous>, transform_indices = @transform_0, window_bounds = array<i64: 16, 2>}, {pipeline_mode = #tpu.pipeline_mode<synchronous>, transform_indices = @transform_1, window_bounds = array<i64: 1, 32>}, {pipeline_mode = #tpu.pipeline_mode<synchronous>, transform_indices = @transform_2, window_bounds = array<i64: 1, 32>}, {pipeline_mode = #tpu.pipeline_mode<synchronous>, transform_indices = @transform_3, window_bounds = array<i64: 32, 32>}, {pipeline_mode = #tpu.pipeline_mode<synchronous>, transform_indices = @transform_4, window_bounds = array<i64: 1, 32>}, {pipeline_mode = #tpu.pipeline_mode<synchronous>, transform_indices = @transform_5, window_bounds = array<i64: 1, 32>}, {pipeline_mode = #tpu.pipeline_mode<synchronous>, transform_indices = @transform_6, window_bounds = array<i64: 1, 1>}, {transform_indices = @transform_7, window_bounds = array<i64: 7, 16, 2>}]} {
    %c0 = arith.constant 0 : index
    %0 = memref.load %arg2[%c0] : memref<8xf32, #tpu.memory_space<smem>>
    %c1 = arith.constant 1 : index
    %1 = memref.load %arg2[%c1] : memref<8xf32, #tpu.memory_space<smem>>
    %c2 = arith.constant 2 : index
    %2 = memref.load %arg2[%c2] : memref<8xf32, #tpu.memory_space<smem>>
    %c3 = arith.constant 3 : index
    %3 = memref.load %arg2[%c3] : memref<8xf32, #tpu.memory_space<smem>>
    %c4 = arith.constant 4 : index
    %4 = memref.load %arg2[%c4] : memref<8xf32, #tpu.memory_space<smem>>
    %c5 = arith.constant 5 : index
    %5 = memref.load %arg2[%c5] : memref<8xf32, #tpu.memory_space<smem>>
    %c6 = arith.constant 6 : index
    %6 = memref.load %arg2[%c6] : memref<8xf32, #tpu.memory_space<smem>>
    %c7 = arith.constant 7 : index
    %7 = memref.load %arg2[%c7] : memref<8xf32, #tpu.memory_space<smem>>
    %c0_i32 = arith.constant 0 : i32
    %8 = arith.cmpi eq, %arg0, %c0_i32 : i32
    %9 = arith.extui %8 : i1 to i32
    %c0_i32_0 = arith.constant 0 : i32
    %10 = arith.cmpi ne, %9, %c0_i32_0 : i32
    scf.if %10 {
      %c0_26 = arith.constant 0 : index
      %c0_27 = arith.constant 0 : index
      %29 = vector.load %arg3[%c0_26, %c0_27] : memref<16x2xf32, #tpu.memory_space<vmem>>, vector<16x2xf32>
      %c0_28 = arith.constant 0 : index
      %c0_29 = arith.constant 0 : index
      %30 = vector.load %arg11[%c0_28, %c0_29] : memref<16x2xf32, #tpu.memory_space<vmem>>, vector<16x2xf32>
      tpu.vector_store %arg11[%c0_28, %c0_29], %29 {strides = array<i32>} : memref<16x2xf32, #tpu.memory_space<vmem>>, vector<16x2xf32>,
    } else {
    }
    %c0_1 = arith.constant 0 : index
    %c0_2 = arith.constant 0 : index
    %11 = vector.load %arg4[%c0_1, %c0_2] : memref<1x32xf32, #tpu.memory_space<vmem>>, vector<1x32xf32>
    %c0_3 = arith.constant 0 : index
    %c0_4 = arith.constant 0 : index
    %12 = vector.load %arg5[%c0_3, %c0_4] : memref<1x32xf32, #tpu.memory_space<vmem>>, vector<1x32xf32>
    %c0_5 = arith.constant 0 : index
    %c0_6 = arith.constant 0 : index
    %13 = vector.load %arg6[%c0_5, %c0_6] : memref<32x32xf32, #tpu.memory_space<vmem>>, vector<32x32xf32>
    %c0_7 = arith.constant 0 : index
    %c0_8 = arith.constant 0 : index
    %14 = vector.load %arg7[%c0_7, %c0_8] : memref<1x32xf32, #tpu.memory_space<vmem>>, vector<1x32xf32>
    %c0_9 = arith.constant 0 : index
    %c0_10 = arith.constant 0 : index
    %15 = vector.load %arg8[%c0_9, %c0_10] : memref<1x32xf32, #tpu.memory_space<vmem>>, vector<1x32xf32>
    %c0_11 = arith.constant 0 : index
    %c0_12 = arith.constant 0 : index
    %16 = vector.load %arg9[%c0_11, %c0_12] : memref<1x1xf32, #tpu.memory_space<vmem>>, vector<1x1xf32>
    %17 = tpu.iota {dimensions = array<i32: 0>} : vector<16x1xi32>
    %18 = tpu.iota {dimensions = array<i32: 1>} : vector<16x2xi32>
    %c0_i32_13 = arith.constant 0 : i32
    %19 = vector.broadcast %c0_i32_13 : i32 to vector<16x1xi32>
    %20 = arith.cmpi eq, %17, %19 : vector<16x1xi32>
    %c15_i32 = arith.constant 15 : i32
    %21 = vector.broadcast %c15_i32 : i32 to vector<16x1xi32>
    %22 = arith.cmpi eq, %17, %21 : vector<16x1xi32>
    %c0_14 = arith.constant 0 : index
    %c0_15 = arith.constant 0 : index
    %23 = vector.load %arg11[%c0_14, %c0_15] : memref<16x2xf32, #tpu.memory_space<vmem>>, vector<16x2xf32>
    %c0_i32_16 = arith.constant 0 : i32
    %c7_i32 = arith.constant 7 : i32
    %24 = arith.addi %c0_i32_16, %c7_i32 : i32
    %c1_i32 = arith.constant 1 : i32
    %25 = scf.for %arg13 = %c0_i32_16 to %24 step %c1_i32 iter_args(%arg14 = %23) -> (vector<16x2xf32>)  : i32 {
      %c7_i32_26 = arith.constant 7 : i32
      %29 = arith.muli %arg0, %c7_i32_26 : i32
      %30 = arith.addi %29, %arg13 : i32
      %c0_27 = arith.constant 0 : index
      %31 = arith.index_cast %30 : i32 to index
      %32 = memref.load %arg1[%c0_27, %31] : memref<3x7xf32, #tpu.memory_space<smem>>
      %c1_28 = arith.constant 1 : index
      %33 = arith.index_cast %30 : i32 to index
      %34 = memref.load %arg1[%c1_28, %33] : memref<3x7xf32, #tpu.memory_space<smem>>
      %c2_29 = arith.constant 2 : index
      %35 = arith.index_cast %30 : i32 to index
      %36 = memref.load %arg1[%c2_29, %35] : memref<3x7xf32, #tpu.memory_space<smem>>
      %37 = vector.extract_strided_slice %arg14 {offsets = [0, 0], sizes = [16, 1], strides = [1, 1]} : vector<16x2xf32> to vector<16x1xf32>
      %38 = vector.broadcast %37 : vector<16x1xf32> to vector<16x32xf32>
      %39 = vector.broadcast %11 : vector<1x32xf32> to vector<16x32xf32>
      %40 = arith.mulf %38, %39 : vector<16x32xf32>
      %41 = vector.broadcast %12 : vector<1x32xf32> to vector<16x32xf32>
      %42 = arith.addf %40, %41 : vector<16x32xf32>
      %43 = math.tanh %42 : vector<16x32xf32>
      %cst = arith.constant dense<0.000000e+00> : vector<16x32xf32>
      %44 = tpu.matmul %43, %13, %cst {dimension_numbers = #tpu.dot_dimension_numbers<[1], [0], [0], [1], [0, 0, 1, 1], [], []>} : vector<16x32xf32>, vector<32x32xf32>, vector<16x32xf32> -> vector<16x32xf32>
      %45 = vector.broadcast %14 : vector<1x32xf32> to vector<16x32xf32>
      %46 = arith.addf %44, %45 : vector<16x32xf32>
      %47 = math.tanh %46 : vector<16x32xf32>
      %48 = vector.broadcast %15 : vector<1x32xf32> to vector<16x32xf32>
      %49 = arith.mulf %47, %48 : vector<16x32xf32>
      %cst_30 = arith.constant dense<0.000000e+00> : vector<16xf32>
      %50 = vector.multi_reduction <add>, %49, %cst_30 [1] : vector<16x32xf32> to vector<16xf32>
      %51 = vector.shape_cast %50 : vector<16xf32> to vector<16x1xf32>
      %52 = vector.broadcast %16 : vector<1x1xf32> to vector<16x1xf32>
      %53 = arith.addf %51, %52 : vector<16x1xf32>
      %54 = arith.negf %53 : vector<16x1xf32>
      %55 = math.exp %54 : vector<16x1xf32>
      %cst_31 = arith.constant 1.000000e+00 : f32
      %56 = vector.broadcast %cst_31 : f32 to vector<16x1xf32>
      %57 = arith.addf %56, %55 : vector<16x1xf32>
      %58 = arith.divf %56, %57 : vector<16x1xf32>
      %59 = vector.broadcast %6 : f32 to vector<16x1xf32>
      %60 = arith.mulf %58, %59 : vector<16x1xf32>
      %c1_i32_32 = arith.constant 1 : i32
      %61 = tpu.dynamic_rotate %37 by %c1_i32_32 dim 0 : vector<16x1xf32>, i32 -> vector<16x1xf32>
      %c15_i32_33 = arith.constant 15 : i32
      %62 = tpu.dynamic_rotate %37 by %c15_i32_33 dim 0 : vector<16x1xf32>, i32 -> vector<16x1xf32>
      %63 = vector.broadcast %2 : f32 to vector<16x1xf32>
      %64 = arith.select %20, %63, %61 : vector<16x1xi1>, vector<16x1xf32>
      %65 = vector.broadcast %3 : f32 to vector<16x1xf32>
      %66 = arith.select %20, %65, %61 : vector<16x1xi1>, vector<16x1xf32>
      %67 = arith.mulf %0, %7 : f32
      %68 = arith.subf %61, %37 : vector<16x1xf32>
      %69 = vector.broadcast %67 : f32 to vector<16x1xf32>
      %70 = arith.mulf %69, %68 : vector<16x1xf32>
      %71 = arith.select %22, %70, %62 : vector<16x1xi1>, vector<16x1xf32>
      %72 = vector.broadcast %0 : f32 to vector<16x1xf32>
      %73 = arith.mulf %72, %60 : vector<16x1xf32>
      %74 = vector.broadcast %4 : f32 to vector<16x1xf32>
      %75 = arith.mulf %74, %37 : vector<16x1xf32>
      %76 = vector.broadcast %5 : f32 to vector<16x1xf32>
      %77 = arith.mulf %76, %64 : vector<16x1xf32>
      %78 = arith.addf %75, %77 : vector<16x1xf32>
      %79 = arith.mulf %73, %78 : vector<16x1xf32>
      %80 = vector.broadcast %0 : f32 to vector<16x1xf32>
      %81 = arith.mulf %80, %60 : vector<16x1xf32>
      %82 = vector.broadcast %4 : f32 to vector<16x1xf32>
      %83 = arith.mulf %82, %37 : vector<16x1xf32>
      %84 = vector.broadcast %5 : f32 to vector<16x1xf32>
      %85 = arith.mulf %84, %71 : vector<16x1xf32>
      %86 = arith.addf %83, %85 : vector<16x1xf32>
      %87 = arith.mulf %81, %86 : vector<16x1xf32>
      %88 = arith.addf %79, %87 : vector<16x1xf32>
      %89 = vector.broadcast %4 : f32 to vector<16x1xf32>
      %90 = arith.mulf %89, %37 : vector<16x1xf32>
      %91 = vector.broadcast %5 : f32 to vector<16x1xf32>
      %92 = arith.mulf %91, %66 : vector<16x1xf32>
      %93 = arith.addf %90, %92 : vector<16x1xf32>
      %94 = vector.broadcast %1 : f32 to vector<16x1xf32>
      %95 = arith.mulf %94, %93 : vector<16x1xf32>
      %96 = vector.broadcast %4 : f32 to vector<16x1xf32>
      %97 = arith.mulf %96, %37 : vector<16x1xf32>
      %98 = vector.broadcast %5 : f32 to vector<16x1xf32>
      %99 = arith.mulf %98, %71 : vector<16x1xf32>
      %100 = arith.addf %97, %99 : vector<16x1xf32>
      %101 = vector.broadcast %1 : f32 to vector<16x1xf32>
      %102 = arith.mulf %101, %100 : vector<16x1xf32>
      %103 = arith.addf %95, %102 : vector<16x1xf32>
      %c0_i32_34 = arith.constant 0 : i32
      %104 = vector.broadcast %c0_i32_34 : i32 to vector<16x2xi32>
      %105 = arith.cmpi eq, %18, %104 : vector<16x2xi32>
      %106 = vector.shape_cast %88 : vector<16x1xf32> to vector<16x1xf32>
      %107 = vector.broadcast %106 : vector<16x1xf32> to vector<16x2xf32>
      %108 = vector.shape_cast %103 : vector<16x1xf32> to vector<16x1xf32>
      %109 = vector.broadcast %108 : vector<16x1xf32> to vector<16x2xf32>
      %110 = arith.select %105, %107, %109 : vector<16x2xi1>, vector<16x2xf32>
      %111 = vector.broadcast %34 : f32 to vector<16x2xf32>
      %112 = arith.mulf %111, %110 : vector<16x2xf32>
      %113 = arith.addf %arg14, %112 : vector<16x2xf32>
      %114 = vector.extract_strided_slice %113 {offsets = [0, 0], sizes = [16, 1], strides = [1, 1]} : vector<16x2xf32> to vector<16x1xf32>
      %115 = vector.broadcast %114 : vector<16x1xf32> to vector<16x32xf32>
      %116 = vector.broadcast %11 : vector<1x32xf32> to vector<16x32xf32>
      %117 = arith.mulf %115, %116 : vector<16x32xf32>
      %118 = vector.broadcast %12 : vector<1x32xf32> to vector<16x32xf32>
      %119 = arith.addf %117, %118 : vector<16x32xf32>
      %120 = math.tanh %119 : vector<16x32xf32>
      %cst_35 = arith.constant dense<0.000000e+00> : vector<16x32xf32>
      %121 = tpu.matmul %120, %13, %cst_35 {dimension_numbers = #tpu.dot_dimension_numbers<[1], [0], [0], [1], [0, 0, 1, 1], [], []>} : vector<16x32xf32>, vector<32x32xf32>, vector<16x32xf32> -> vector<16x32xf32>
      %122 = vector.broadcast %14 : vector<1x32xf32> to vector<16x32xf32>
      %123 = arith.addf %121, %122 : vector<16x32xf32>
      %124 = math.tanh %123 : vector<16x32xf32>
      %125 = vector.broadcast %15 : vector<1x32xf32> to vector<16x32xf32>
      %126 = arith.mulf %124, %125 : vector<16x32xf32>
      %cst_36 = arith.constant dense<0.000000e+00> : vector<16xf32>
      %127 = vector.multi_reduction <add>, %126, %cst_36 [1] : vector<16x32xf32> to vector<16xf32>
      %128 = vector.shape_cast %127 : vector<16xf32> to vector<16x1xf32>
      %129 = vector.broadcast %16 : vector<1x1xf32> to vector<16x1xf32>
      %130 = arith.addf %128, %129 : vector<16x1xf32>
      %131 = arith.negf %130 : vector<16x1xf32>
      %132 = math.exp %131 : vector<16x1xf32>
      %cst_37 = arith.constant 1.000000e+00 : f32
      %133 = vector.broadcast %cst_37 : f32 to vector<16x1xf32>
      %134 = arith.addf %133, %132 : vector<16x1xf32>
      %135 = arith.divf %133, %134 : vector<16x1xf32>
      %136 = vector.broadcast %6 : f32 to vector<16x1xf32>
      %137 = arith.mulf %135, %136 : vector<16x1xf32>
      %c1_i32_38 = arith.constant 1 : i32
      %138 = tpu.dynamic_rotate %114 by %c1_i32_38 dim 0 : vector<16x1xf32>, i32 -> vector<16x1xf32>
      %c15_i32_39 = arith.constant 15 : i32
      %139 = tpu.dynamic_rotate %114 by %c15_i32_39 dim 0 : vector<16x1xf32>, i32 -> vector<16x1xf32>
      %140 = vector.broadcast %2 : f32 to vector<16x1xf32>
      %141 = arith.select %20, %140, %138 : vector<16x1xi1>, vector<16x1xf32>
      %142 = vector.broadcast %3 : f32 to vector<16x1xf32>
      %143 = arith.select %20, %142, %138 : vector<16x1xi1>, vector<16x1xf32>
      %144 = arith.mulf %0, %7 : f32
      %145 = arith.subf %138, %114 : vector<16x1xf32>
      %146 = vector.broadcast %144 : f32 to vector<16x1xf32>
      %147 = arith.mulf %146, %145 : vector<16x1xf32>
      %148 = arith.select %22, %147, %139 : vector<16x1xi1>, vector<16x1xf32>
      %149 = vector.broadcast %0 : f32 to vector<16x1xf32>
      %150 = arith.mulf %149, %137 : vector<16x1xf32>
      %151 = vector.broadcast %4 : f32 to vector<16x1xf32>
      %152 = arith.mulf %151, %114 : vector<16x1xf32>
      %153 = vector.broadcast %5 : f32 to vector<16x1xf32>
      %154 = arith.mulf %153, %141 : vector<16x1xf32>
      %155 = arith.addf %152, %154 : vector<16x1xf32>
      %156 = arith.mulf %150, %155 : vector<16x1xf32>
      %157 = vector.broadcast %0 : f32 to vector<16x1xf32>
      %158 = arith.mulf %157, %137 : vector<16x1xf32>
      %159 = vector.broadcast %4 : f32 to vector<16x1xf32>
      %160 = arith.mulf %159, %114 : vector<16x1xf32>
      %161 = vector.broadcast %5 : f32 to vector<16x1xf32>
      %162 = arith.mulf %161, %148 : vector<16x1xf32>
      %163 = arith.addf %160, %162 : vector<16x1xf32>
      %164 = arith.mulf %158, %163 : vector<16x1xf32>
      %165 = arith.addf %156, %164 : vector<16x1xf32>
      %166 = vector.broadcast %4 : f32 to vector<16x1xf32>
      %167 = arith.mulf %166, %114 : vector<16x1xf32>
      %168 = vector.broadcast %5 : f32 to vector<16x1xf32>
      %169 = arith.mulf %168, %143 : vector<16x1xf32>
      %170 = arith.addf %167, %169 : vector<16x1xf32>
      %171 = vector.broadcast %1 : f32 to vector<16x1xf32>
      %172 = arith.mulf %171, %170 : vector<16x1xf32>
      %173 = vector.broadcast %4 : f32 to vector<16x1xf32>
      %174 = arith.mulf %173, %114 : vector<16x1xf32>
      %175 = vector.broadcast %5 : f32 to vector<16x1xf32>
      %176 = arith.mulf %175, %148 : vector<16x1xf32>
      %177 = arith.addf %174, %176 : vector<16x1xf32>
      %178 = vector.broadcast %1 : f32 to vector<16x1xf32>
      %179 = arith.mulf %178, %177 : vector<16x1xf32>
      %180 = arith.addf %172, %179 : vector<16x1xf32>
      %c0_i32_40 = arith.constant 0 : i32
      %181 = vector.broadcast %c0_i32_40 : i32 to vector<16x2xi32>
      %182 = arith.cmpi eq, %18, %181 : vector<16x2xi32>
      %183 = vector.shape_cast %165 : vector<16x1xf32> to vector<16x1xf32>
      %184 = vector.broadcast %183 : vector<16x1xf32> to vector<16x2xf32>
      %185 = vector.shape_cast %180 : vector<16x1xf32> to vector<16x1xf32>
      %186 = vector.broadcast %185 : vector<16x1xf32> to vector<16x2xf32>
      %187 = arith.select %182, %184, %186 : vector<16x2xi1>, vector<16x2xf32>
      %188 = vector.broadcast %34 : f32 to vector<16x2xf32>
      %189 = arith.mulf %188, %187 : vector<16x2xf32>
      %190 = arith.addf %arg14, %189 : vector<16x2xf32>
      %191 = vector.extract_strided_slice %190 {offsets = [0, 0], sizes = [16, 1], strides = [1, 1]} : vector<16x2xf32> to vector<16x1xf32>
      %192 = vector.broadcast %191 : vector<16x1xf32> to vector<16x32xf32>
      %193 = vector.broadcast %11 : vector<1x32xf32> to vector<16x32xf32>
      %194 = arith.mulf %192, %193 : vector<16x32xf32>
      %195 = vector.broadcast %12 : vector<1x32xf32> to vector<16x32xf32>
      %196 = arith.addf %194, %195 : vector<16x32xf32>
      %197 = math.tanh %196 : vector<16x32xf32>
      %cst_41 = arith.constant dense<0.000000e+00> : vector<16x32xf32>
      %198 = tpu.matmul %197, %13, %cst_41 {dimension_numbers = #tpu.dot_dimension_numbers<[1], [0], [0], [1], [0, 0, 1, 1], [], []>} : vector<16x32xf32>, vector<32x32xf32>, vector<16x32xf32> -> vector<16x32xf32>
      %199 = vector.broadcast %14 : vector<1x32xf32> to vector<16x32xf32>
      %200 = arith.addf %198, %199 : vector<16x32xf32>
      %201 = math.tanh %200 : vector<16x32xf32>
      %202 = vector.broadcast %15 : vector<1x32xf32> to vector<16x32xf32>
      %203 = arith.mulf %201, %202 : vector<16x32xf32>
      %cst_42 = arith.constant dense<0.000000e+00> : vector<16xf32>
      %204 = vector.multi_reduction <add>, %203, %cst_42 [1] : vector<16x32xf32> to vector<16xf32>
      %205 = vector.shape_cast %204 : vector<16xf32> to vector<16x1xf32>
      %206 = vector.broadcast %16 : vector<1x1xf32> to vector<16x1xf32>
      %207 = arith.addf %205, %206 : vector<16x1xf32>
      %208 = arith.negf %207 : vector<16x1xf32>
      %209 = math.exp %208 : vector<16x1xf32>
      %cst_43 = arith.constant 1.000000e+00 : f32
      %210 = vector.broadcast %cst_43 : f32 to vector<16x1xf32>
      %211 = arith.addf %210, %209 : vector<16x1xf32>
      %212 = arith.divf %210, %211 : vector<16x1xf32>
      %213 = vector.broadcast %6 : f32 to vector<16x1xf32>
      %214 = arith.mulf %212, %213 : vector<16x1xf32>
      %c1_i32_44 = arith.constant 1 : i32
      %215 = tpu.dynamic_rotate %191 by %c1_i32_44 dim 0 : vector<16x1xf32>, i32 -> vector<16x1xf32>
      %c15_i32_45 = arith.constant 15 : i32
      %216 = tpu.dynamic_rotate %191 by %c15_i32_45 dim 0 : vector<16x1xf32>, i32 -> vector<16x1xf32>
      %217 = vector.broadcast %2 : f32 to vector<16x1xf32>
      %218 = arith.select %20, %217, %215 : vector<16x1xi1>, vector<16x1xf32>
      %219 = vector.broadcast %3 : f32 to vector<16x1xf32>
      %220 = arith.select %20, %219, %215 : vector<16x1xi1>, vector<16x1xf32>
      %221 = arith.mulf %0, %7 : f32
      %222 = arith.subf %215, %191 : vector<16x1xf32>
      %223 = vector.broadcast %221 : f32 to vector<16x1xf32>
      %224 = arith.mulf %223, %222 : vector<16x1xf32>
      %225 = arith.select %22, %224, %216 : vector<16x1xi1>, vector<16x1xf32>
      %226 = vector.broadcast %0 : f32 to vector<16x1xf32>
      %227 = arith.mulf %226, %214 : vector<16x1xf32>
      %228 = vector.broadcast %4 : f32 to vector<16x1xf32>
      %229 = arith.mulf %228, %191 : vector<16x1xf32>
      %230 = vector.broadcast %5 : f32 to vector<16x1xf32>
      %231 = arith.mulf %230, %218 : vector<16x1xf32>
      %232 = arith.addf %229, %231 : vector<16x1xf32>
      %233 = arith.mulf %227, %232 : vector<16x1xf32>
      %234 = vector.broadcast %0 : f32 to vector<16x1xf32>
      %235 = arith.mulf %234, %214 : vector<16x1xf32>
      %236 = vector.broadcast %4 : f32 to vector<16x1xf32>
      %237 = arith.mulf %236, %191 : vector<16x1xf32>
      %238 = vector.broadcast %5 : f32 to vector<16x1xf32>
      %239 = arith.mulf %238, %225 : vector<16x1xf32>
      %240 = arith.addf %237, %239 : vector<16x1xf32>
      %241 = arith.mulf %235, %240 : vector<16x1xf32>
      %242 = arith.addf %233, %241 : vector<16x1xf32>
      %243 = vector.broadcast %4 : f32 to vector<16x1xf32>
      %244 = arith.mulf %243, %191 : vector<16x1xf32>
      %245 = vector.broadcast %5 : f32 to vector<16x1xf32>
      %246 = arith.mulf %245, %220 : vector<16x1xf32>
      %247 = arith.addf %244, %246 : vector<16x1xf32>
      %248 = vector.broadcast %1 : f32 to vector<16x1xf32>
      %249 = arith.mulf %248, %247 : vector<16x1xf32>
      %250 = vector.broadcast %4 : f32 to vector<16x1xf32>
      %251 = arith.mulf %250, %191 : vector<16x1xf32>
      %252 = vector.broadcast %5 : f32 to vector<16x1xf32>
      %253 = arith.mulf %252, %225 : vector<16x1xf32>
      %254 = arith.addf %251, %253 : vector<16x1xf32>
      %255 = vector.broadcast %1 : f32 to vector<16x1xf32>
      %256 = arith.mulf %255, %254 : vector<16x1xf32>
      %257 = arith.addf %249, %256 : vector<16x1xf32>
      %c0_i32_46 = arith.constant 0 : i32
      %258 = vector.broadcast %c0_i32_46 : i32 to vector<16x2xi32>
      %259 = arith.cmpi eq, %18, %258 : vector<16x2xi32>
      %260 = vector.shape_cast %242 : vector<16x1xf32> to vector<16x1xf32>
      %261 = vector.broadcast %260 : vector<16x1xf32> to vector<16x2xf32>
      %262 = vector.shape_cast %257 : vector<16x1xf32> to vector<16x1xf32>
      %263 = vector.broadcast %262 : vector<16x1xf32> to vector<16x2xf32>
      %264 = arith.select %259, %261, %263 : vector<16x2xi1>, vector<16x2xf32>
      %265 = vector.broadcast %32 : f32 to vector<16x2xf32>
      %266 = arith.mulf %265, %264 : vector<16x2xf32>
      %267 = arith.addf %arg14, %266 : vector<16x2xf32>
      %268 = vector.extract_strided_slice %267 {offsets = [0, 0], sizes = [16, 1], strides = [1, 1]} : vector<16x2xf32> to vector<16x1xf32>
      %269 = vector.broadcast %268 : vector<16x1xf32> to vector<16x32xf32>
      %270 = vector.broadcast %11 : vector<1x32xf32> to vector<16x32xf32>
      %271 = arith.mulf %269, %270 : vector<16x32xf32>
      %272 = vector.broadcast %12 : vector<1x32xf32> to vector<16x32xf32>
      %273 = arith.addf %271, %272 : vector<16x32xf32>
      %274 = math.tanh %273 : vector<16x32xf32>
      %cst_47 = arith.constant dense<0.000000e+00> : vector<16x32xf32>
      %275 = tpu.matmul %274, %13, %cst_47 {dimension_numbers = #tpu.dot_dimension_numbers<[1], [0], [0], [1], [0, 0, 1, 1], [], []>} : vector<16x32xf32>, vector<32x32xf32>, vector<16x32xf32> -> vector<16x32xf32>
      %276 = vector.broadcast %14 : vector<1x32xf32> to vector<16x32xf32>
      %277 = arith.addf %275, %276 : vector<16x32xf32>
      %278 = math.tanh %277 : vector<16x32xf32>
      %279 = vector.broadcast %15 : vector<1x32xf32> to vector<16x32xf32>
      %280 = arith.mulf %278, %279 : vector<16x32xf32>
      %cst_48 = arith.constant dense<0.000000e+00> : vector<16xf32>
      %281 = vector.multi_reduction <add>, %280, %cst_48 [1] : vector<16x32xf32> to vector<16xf32>
      %282 = vector.shape_cast %281 : vector<16xf32> to vector<16x1xf32>
      %283 = vector.broadcast %16 : vector<1x1xf32> to vector<16x1xf32>
      %284 = arith.addf %282, %283 : vector<16x1xf32>
      %285 = arith.negf %284 : vector<16x1xf32>
      %286 = math.exp %285 : vector<16x1xf32>
      %cst_49 = arith.constant 1.000000e+00 : f32
      %287 = vector.broadcast %cst_49 : f32 to vector<16x1xf32>
      %288 = arith.addf %287, %286 : vector<16x1xf32>
      %289 = arith.divf %287, %288 : vector<16x1xf32>
      %290 = vector.broadcast %6 : f32 to vector<16x1xf32>
      %291 = arith.mulf %289, %290 : vector<16x1xf32>
      %c1_i32_50 = arith.constant 1 : i32
      %292 = tpu.dynamic_rotate %268 by %c1_i32_50 dim 0 : vector<16x1xf32>, i32 -> vector<16x1xf32>
      %c15_i32_51 = arith.constant 15 : i32
      %293 = tpu.dynamic_rotate %268 by %c15_i32_51 dim 0 : vector<16x1xf32>, i32 -> vector<16x1xf32>
      %294 = vector.broadcast %2 : f32 to vector<16x1xf32>
      %295 = arith.select %20, %294, %292 : vector<16x1xi1>, vector<16x1xf32>
      %296 = vector.broadcast %3 : f32 to vector<16x1xf32>
      %297 = arith.select %20, %296, %292 : vector<16x1xi1>, vector<16x1xf32>
      %298 = arith.mulf %0, %7 : f32
      %299 = arith.subf %292, %268 : vector<16x1xf32>
      %300 = vector.broadcast %298 : f32 to vector<16x1xf32>
      %301 = arith.mulf %300, %299 : vector<16x1xf32>
      %302 = arith.select %22, %301, %293 : vector<16x1xi1>, vector<16x1xf32>
      %303 = vector.broadcast %0 : f32 to vector<16x1xf32>
      %304 = arith.mulf %303, %291 : vector<16x1xf32>
      %305 = vector.broadcast %4 : f32 to vector<16x1xf32>
      %306 = arith.mulf %305, %268 : vector<16x1xf32>
      %307 = vector.broadcast %5 : f32 to vector<16x1xf32>
      %308 = arith.mulf %307, %295 : vector<16x1xf32>
      %309 = arith.addf %306, %308 : vector<16x1xf32>
      %310 = arith.mulf %304, %309 : vector<16x1xf32>
      %311 = vector.broadcast %0 : f32 to vector<16x1xf32>
      %312 = arith.mulf %311, %291 : vector<16x1xf32>
      %313 = vector.broadcast %4 : f32 to vector<16x1xf32>
      %314 = arith.mulf %313, %268 : vector<16x1xf32>
      %315 = vector.broadcast %5 : f32 to vector<16x1xf32>
      %316 = arith.mulf %315, %302 : vector<16x1xf32>
      %317 = arith.addf %314, %316 : vector<16x1xf32>
      %318 = arith.mulf %312, %317 : vector<16x1xf32>
      %319 = arith.addf %310, %318 : vector<16x1xf32>
      %320 = vector.broadcast %4 : f32 to vector<16x1xf32>
      %321 = arith.mulf %320, %268 : vector<16x1xf32>
      %322 = vector.broadcast %5 : f32 to vector<16x1xf32>
      %323 = arith.mulf %322, %297 : vector<16x1xf32>
      %324 = arith.addf %321, %323 : vector<16x1xf32>
      %325 = vector.broadcast %1 : f32 to vector<16x1xf32>
      %326 = arith.mulf %325, %324 : vector<16x1xf32>
      %327 = vector.broadcast %4 : f32 to vector<16x1xf32>
      %328 = arith.mulf %327, %268 : vector<16x1xf32>
      %329 = vector.broadcast %5 : f32 to vector<16x1xf32>
      %330 = arith.mulf %329, %302 : vector<16x1xf32>
      %331 = arith.addf %328, %330 : vector<16x1xf32>
      %332 = vector.broadcast %1 : f32 to vector<16x1xf32>
      %333 = arith.mulf %332, %331 : vector<16x1xf32>
      %334 = arith.addf %326, %333 : vector<16x1xf32>
      %c0_i32_52 = arith.constant 0 : i32
      %335 = vector.broadcast %c0_i32_52 : i32 to vector<16x2xi32>
      %336 = arith.cmpi eq, %18, %335 : vector<16x2xi32>
      %337 = vector.shape_cast %319 : vector<16x1xf32> to vector<16x1xf32>
      %338 = vector.broadcast %337 : vector<16x1xf32> to vector<16x2xf32>
      %339 = vector.shape_cast %334 : vector<16x1xf32> to vector<16x1xf32>
      %340 = vector.broadcast %339 : vector<16x1xf32> to vector<16x2xf32>
      %341 = arith.select %336, %338, %340 : vector<16x2xi1>, vector<16x2xf32>
      %cst_53 = arith.constant 2.000000e+00 : f32
      %342 = vector.broadcast %cst_53 : f32 to vector<16x2xf32>
      %343 = arith.mulf %342, %187 : vector<16x2xf32>
      %344 = arith.addf %110, %343 : vector<16x2xf32>
      %cst_54 = arith.constant 2.000000e+00 : f32
      %345 = vector.broadcast %cst_54 : f32 to vector<16x2xf32>
      %346 = arith.mulf %345, %264 : vector<16x2xf32>
      %347 = arith.addf %344, %346 : vector<16x2xf32>
      %348 = arith.addf %347, %341 : vector<16x2xf32>
      %349 = vector.broadcast %36 : f32 to vector<16x2xf32>
      %350 = arith.mulf %349, %348 : vector<16x2xf32>
      %351 = arith.addf %arg14, %350 : vector<16x2xf32>
      %352 = arith.index_cast %arg13 : i32 to index
      %c0_55 = arith.constant 0 : index
      %c0_56 = arith.constant 0 : index
      %353 = vector.load %arg12[%352, %c0_55, %c0_56] : memref<7x16x2xf32, #tpu.memory_space<vmem>>, vector<1x16x2xf32>
      %354 = vector.shape_cast %353 : vector<1x16x2xf32> to vector<16x2xf32>
      %355 = vector.shape_cast %351 : vector<16x2xf32> to vector<1x16x2xf32>
      tpu.vector_store %arg12[%352, %c0_55, %c0_56], %355 {strides = array<i32>} : memref<7x16x2xf32, #tpu.memory_space<vmem>>, vector<1x16x2xf32>,
      scf.yield %351 : vector<16x2xf32>
    }
    %c7_i32_17 = arith.constant 7 : i32
    %c0_18 = arith.constant 0 : index
    %c0_19 = arith.constant 0 : index
    %26 = vector.load %arg11[%c0_18, %c0_19] : memref<16x2xf32, #tpu.memory_space<vmem>>, vector<16x2xf32>
    tpu.vector_store %arg11[%c0_18, %c0_19], %25 {strides = array<i32>} : memref<16x2xf32, #tpu.memory_space<vmem>>, vector<16x2xf32>,
    %c0_20 = arith.constant 0 : index
    %c0_21 = arith.constant 0 : index
    %c0_22 = arith.constant 0 : index
    %27 = vector.load %arg12[%c0_20, %c0_21, %c0_22] : memref<7x16x2xf32, #tpu.memory_space<vmem>>, vector<7x16x2xf32>
    %c0_23 = arith.constant 0 : index
    %c0_24 = arith.constant 0 : index
    %c0_25 = arith.constant 0 : index
    %28 = vector.load %arg10[%c0_23, %c0_24, %c0_25] : memref<7x16x2xf32, #tpu.memory_space<vmem>>, vector<7x16x2xf32>
    tpu.vector_store %arg10[%c0_23, %c0_24, %c0_25], %27 {strides = array<i32>} : memref<7x16x2xf32, #tpu.memory_space<vmem>>, vector<7x16x2xf32>,
    return
  }
  func.func @transform_0(%arg0: i32, %arg1: memref<3x7xf32, #tpu.memory_space<smem>>, %arg2: memref<8xf32, #tpu.memory_space<smem>>) -> (i32, i32) {
    %c0_i32 = arith.constant 0 : i32
    %c0_i32_0 = arith.constant 0 : i32
    %c0_i32_1 = arith.constant 0 : i32
    return %c0_i32, %c0_i32_0 : i32, i32
  }
  func.func @transform_1(%arg0: i32, %arg1: memref<3x7xf32, #tpu.memory_space<smem>>, %arg2: memref<8xf32, #tpu.memory_space<smem>>) -> (i32, i32) {
    %c0_i32 = arith.constant 0 : i32
    %c0_i32_0 = arith.constant 0 : i32
    %c0_i32_1 = arith.constant 0 : i32
    return %c0_i32, %c0_i32_0 : i32, i32
  }
  func.func @transform_2(%arg0: i32, %arg1: memref<3x7xf32, #tpu.memory_space<smem>>, %arg2: memref<8xf32, #tpu.memory_space<smem>>) -> (i32, i32) {
    %c0_i32 = arith.constant 0 : i32
    %c0_i32_0 = arith.constant 0 : i32
    %c0_i32_1 = arith.constant 0 : i32
    return %c0_i32, %c0_i32_0 : i32, i32
  }
  func.func @transform_3(%arg0: i32, %arg1: memref<3x7xf32, #tpu.memory_space<smem>>, %arg2: memref<8xf32, #tpu.memory_space<smem>>) -> (i32, i32) {
    %c0_i32 = arith.constant 0 : i32
    %c0_i32_0 = arith.constant 0 : i32
    %c0_i32_1 = arith.constant 0 : i32
    return %c0_i32, %c0_i32_0 : i32, i32
  }
  func.func @transform_4(%arg0: i32, %arg1: memref<3x7xf32, #tpu.memory_space<smem>>, %arg2: memref<8xf32, #tpu.memory_space<smem>>) -> (i32, i32) {
    %c0_i32 = arith.constant 0 : i32
    %c0_i32_0 = arith.constant 0 : i32
    %c0_i32_1 = arith.constant 0 : i32
    return %c0_i32, %c0_i32_0 : i32, i32
  }
  func.func @transform_5(%arg0: i32, %arg1: memref<3x7xf32, #tpu.memory_space<smem>>, %arg2: memref<8xf32, #tpu.memory_space<smem>>) -> (i32, i32) {
    %c0_i32 = arith.constant 0 : i32
    %c0_i32_0 = arith.constant 0 : i32
    %c0_i32_1 = arith.constant 0 : i32
    return %c0_i32, %c0_i32_0 : i32, i32
  }
  func.func @transform_6(%arg0: i32, %arg1: memref<3x7xf32, #tpu.memory_space<smem>>, %arg2: memref<8xf32, #tpu.memory_space<smem>>) -> (i32, i32) {
    %c0_i32 = arith.constant 0 : i32
    %c0_i32_0 = arith.constant 0 : i32
    %c0_i32_1 = arith.constant 0 : i32
    return %c0_i32, %c0_i32_0 : i32, i32
  }
  func.func @transform_7(%arg0: i32, %arg1: memref<3x7xf32, #tpu.memory_space<smem>>, %arg2: memref<8xf32, #tpu.memory_space<smem>>) -> (i32, i32, i32) {
    %c0_i32 = arith.constant 0 : i32
    %c0_i32_0 = arith.constant 0 : i32
    %c0_i32_1 = arith.constant 0 : i32
    return %arg0, %c0_i32, %c0_i32_0 : i32, i32, i32
  }
}

</mosaic_0001>

<llo_original>
// kernel: forward.1
$region0: #{forward.1}
  #allocation0 [shape = 'u32[]', space=smem, size = 0x4, offset = 0x4, fixed_abs, tag = 'smem constant byte address 0x4 - core index']
  #allocation1 [shape = 'u32[72,128]{1,0:T(1,128)}', space=vmem, size = 0x9000, scoped, tag = 'internal scratch']
  #allocation2 [shape = 'f32[16,2]{1,0:T(8,128)}', space=vmem, size = 0x2000, scoped, tag = 'scratch operand']
  #allocation3 [shape = 'f32[7,16,2]{2,1,0:T(8,128)}', space=vmem, size = 0xe000, scoped, tag = 'scratch operand']
  #allocation4 [shape = 's32[1]{0}', space=sflag, size = 0x4, scoped, tag = 'scoped memory for forward.1']
  #allocation5 [shape = 'u8[2048]{0}', space=smem, size = 0x800, scoped, tag = 'prefetched SMEM operand 0']
  #allocation6 [shape = 'u8[512]{0}', space=smem, size = 0x200, scoped, tag = 'prefetched SMEM operand 1']
  #allocation7 [shape = 'f32[1,1]{1,0:T(1,128)S(1)}', space=vmem, size = 0x200, scoped, tag = 'scoped memory for forward.1']
  %s0 = inlined_call_operand.vmem [shape: f32[3,7], index: 0, kind: input, shape index: {}]
  %s1 = inlined_call_operand.vmem [shape: f32[8], index: 1, kind: input, shape index: {}]
  %s2 = inlined_call_operand.vmem [shape: f32[16,2], index: 2, kind: input, shape index: {}]
  %s3 = inlined_call_operand.vmem [shape: f32[1,32], index: 3, kind: input, shape index: {}]
  %s4 = inlined_call_operand.vmem [shape: f32[1,32], index: 4, kind: input, shape index: {}]
  %s5 = inlined_call_operand.hbm [shape: f32[32,32], index: 5, kind: input, shape index: {}]
  %s6 = inlined_call_operand.vmem [shape: f32[1,32], index: 6, kind: input, shape index: {}]
  %s7 = inlined_call_operand.vmem [shape: f32[1,32], index: 7, kind: input, shape index: {}]
  %s8 = inlined_call_operand.<no memory space> [shape: f32[1,1], index: 8, kind: input, shape index: {}]
  %s9 = inlined_call_operand.vmem [shape: f32[7,16,2], index: 9, kind: output, shape index: {}]
  %s10 = sld [smem:[#allocation0]]
  $region53: #{forward.1} parent=0
    _
  %s12 = ssub.s32 1, %s10
  %s13 = scalar_select 0, %s12, %s10
  %s15 = sshll.u32 %s0, 4
  %s16 = int_to_ptr.vmem [resolvable:$true] %s15
  %18 = dma.vmem_to_smem %s16, 64, [#allocation5], [#allocation4]
  %s20 = sshll.u32 %s1, 4
  %s21 = int_to_ptr.vmem [resolvable:$true] %s20
  %23 = dma.vmem_to_smem %s21, 16, [#allocation6], [#allocation4]
  %v24 = vstv %s8
  %25 = vst [vmem:[#allocation7] sm:$0x1] %v24
  %27 = dma.done [#allocation4], 80
  %28 = sfence
  $region1: #{forward.1} parent=0
    #allocation8 [shape = 'u8[16384]{0}', space=vmem, size = 0x4000, scoped, tag = 'input window, operand 5, single buffered']
    #allocation9 [shape = 's32[1]{0}', space=sflag, size = 0x4, scoped, tag = 'scoped memory for forward.1']
    %29 = vsyncpa [#allocation9], 0
    // Predicated region
    $region2: #{forward.1} parent=1 // pred_check
      _
    $region3: #{forward.1} parent=1 // pred_check_branch
      %31 = sbr.rel (0) target = $region5
    $region4: #{forward.1} parent=1 // pred_region
      _
    $region5: #{forward.1} parent=1 // pred_fallthru
      _
    // Predicated region
    $region6: #{forward.1} parent=1 // pred_check
      _
    $region7: #{forward.1} parent=1 // pred_check_branch
      %33 = sbr.rel (0) target = $region9
    $region8: #{forward.1} parent=1 // pred_region
      _
    $region9: #{forward.1} parent=1 // pred_fallthru
      _
    // Predicated region
    $region10: #{forward.1} parent=1 // pred_check
      _
    $region11: #{forward.1} parent=1 // pred_check_branch
      %35 = sbr.rel (0) target = $region13
    $region12: #{forward.1} parent=1 // pred_region
      _
    $region13: #{forward.1} parent=1 // pred_fallthru
      _
    // Predicated region
    $region14: #{forward.1} parent=1 // pred_check
      _
    $region15: #{forward.1} parent=1 // pred_check_branch
      %37 = sbr.rel (0) target = $region17
    $region16: #{forward.1} parent=1 // pred_region
      %39 = vsyncadd [#allocation9], 0
      %s40 = sshll.u32 %s5, 4
      %s41 = int_to_ptr.hbm [resolvable:$true] %s40
      %s42 = sshll.u32 [#allocation8], 4
      %s43 = int_to_ptr.vmem [resolvable:$true] %s42
      %48 = dma.hbm_to_vmem [thread:$0]  %s41, 512, %s43, [#allocation9], 128, 128, 8
    $region17: #{forward.1} parent=1 // pred_fallthru
      _
    // Predicated region
    $region18: #{forward.1} parent=1 // pred_check
      _
    $region19: #{forward.1} parent=1 // pred_check_branch
      %50 = sbr.rel (0) target = $region21
    $region20: #{forward.1} parent=1 // pred_region
      _
    $region21: #{forward.1} parent=1 // pred_fallthru
      _
    // Predicated region
    $region22: #{forward.1} parent=1 // pred_check
      _
    $region23: #{forward.1} parent=1 // pred_check_branch
      %52 = sbr.rel (0) target = $region25
    $region24: #{forward.1} parent=1 // pred_region
      _
    $region25: #{forward.1} parent=1 // pred_fallthru
      _
    // Predicated region
    $region26: #{forward.1} parent=1 // pred_check
      _
    $region27: #{forward.1} parent=1 // pred_check_branch
      %54 = sbr.rel (0) target = $region29
    $region28: #{forward.1} parent=1 // pred_region
      _
    $region29: #{forward.1} parent=1 // pred_fallthru
      _
    // Predicated region
    $region30: #{forward.1} parent=1 // pred_check
      _
    $region31: #{forward.1} parent=1 // pred_check_branch
      %56 = sbr.rel (0) target = $region33
    $region32: #{forward.1} parent=1 // pred_region
      %58 = dma.done [#allocation9], 512
    $region33: #{forward.1} parent=1 // pred_fallthru
      _
    %s59 = sld [smem:[#allocation6]]
    %s60 = sld [smem:[#allocation6 + $0x1]]
    %s61 = sld [smem:[#allocation6 + $0x2]]
    %s62 = sld [smem:[#allocation6 + $0x3]]
    %s63 = sld [smem:[#allocation6 + $0x4]]
    %s64 = sld [smem:[#allocation6 + $0x5]]
    %s65 = sld [smem:[#allocation6 + $0x6]]
    %s66 = sld [smem:[#allocation6 + $0x7]]
    %p67 = scmp.eq.s32.totalorder 0, 0
    // Predicated region
    $region34: #{forward.1} parent=1 // pred_check
      %p68 = pneg %p67
    $region35: #{forward.1} parent=1 // pred_check_branch
      %70 = sbr.rel (%p68) target = $region37
    $region36: #{forward.1} parent=1 // pred_region
      %v71 = vld [vmem:[%s2] sm:$0xff]
      %v72 = vld [vmem:[%s2 + $0x8] sm:$0xff]
      %vm73 = vcmask 15360
      %74 = vst.msk [vmem:[#allocation2] sm:$0xff] %vm73, %v71
      %75 = vst.msk [vmem:[#allocation2 + $0x8] sm:$0xff] %vm73, %v72
    $region37: #{forward.1} parent=1 // pred_fallthru
      _
    %v76 = vld [vmem:[%s3] sm:$0x1]
    %v77 = vld [vmem:[%s4] sm:$0x1]
    %v78 = vld [vmem:[#allocation8] sm:$0xff]
    %v79 = vld [vmem:[#allocation8 + $0x8] sm:$0xff]
    %v80 = vld [vmem:[#allocation8 + $0x10] sm:$0xff]
    %v81 = vld [vmem:[#allocation8 + $0x18] sm:$0xff]
    %v82 = vld [vmem:[%s6] sm:$0x1]
    %v83 = vld [vmem:[%s7] sm:$0x1]
    %v84 = vld [vmem:[#allocation7] sm:$0x1]
    %v85 = vlaneseq
    %v86 = vshrl.u32 %v85, 7
    %v87 = vadd.s32 %v86, 8
    %v88 = vlaneseq
    %v89 = vand.u32 %v88, 127
    %vm90 = vcmp.eq.s32.totalorder %v86, 0
    %vm91 = vcmp.eq.s32.totalorder %v87, 0
    %vm92 = vcmp.eq.s32.totalorder %v86, 15
    %vm93 = vcmp.eq.s32.totalorder %v87, 15
    %v94 = vld [vmem:[#allocation2] sm:$0xff]
    %v95 = vld [vmem:[#allocation2 + $0x8] sm:$0xff]
    loop: start=0, step=1, limit=7
    $region38: #{forward.1} parent=1 // loop_pre_header
      _
    $region39: #{forward.1} parent=1 // loop_header
      %s97 = sphi 0, %s101
      %p98 = scmp.ge.s32.totalorder %s97, 7
      %v102 = vphi %v94, %v834
      %v103 = vphi %v95, %v835
    $region40: #{forward.1} parent=1 // loop_header_branch
      %100 = sbr.rel (%p98) target = $region44
    $region41: #{forward.1} parent=1 // loop_body
      %s104 = smul.u32 0, 7
      %s105 = sadd.s32 %s104, %s97
      %s106 = sld [smem:[#allocation5 + %s105]]
      %s107 = sshra.s32 %s105, 7
      %s108 = sand.u32 %s105, 127
      %s109 = sadd.s32 %s107, 1
      %s110 = smul.u32 %s109, 128
      %s111 = sshra.s32 %s105, 7
      %s112 = sand.u32 %s105, 127
      %s113 = sadd.s32 %s110, %s112
      %s114 = sld [smem:[#allocation5 + %s113]]
      %s115 = sadd.s32 %s107, 2
      %s116 = smul.u32 %s115, 128
      %s117 = sadd.s32 %s116, %s112
      %s118 = sld [smem:[#allocation5 + %s117]]
      %120 = vset.pattern.permute.xlu0 0
      %121 = vperm.xlu0 %120, %v102
      %v122 = vpop.permute.xlu0 %121
      %125 = vset.pattern.permute.xlu0 0
      %126 = vperm.xlu0 %125, %v103
      %v127 = vpop.permute.xlu0 %126
      %v130 = vperm.slane %v76, 0
      %v132 = vmul.f32 %v122, %v130
      %v133 = vmul.f32 %v127, %v130
      %v135 = vperm.slane %v77, 0
      %v137 = vadd.f32 %v132, %v135
      %v138 = vadd.f32 %v133, %v135
      %v139 = vtanh.pop %v137
      %v140 = vtanh.pop %v138
      %v142 = vperm.slane %v82, 0
      %vm144 = vcmask 261120
      %v146 = vsel %vm144, %v139, 0
      %v149 = vsel %vm144, %v140, 0
      %151 = vmatpush.msra.mxu0 0.0
      %152 = vmatpush.msra.mxu0 0.0
      %153 = vmatpush.msra.mxu0 0.0
      %154 = vmatpush.msra.mxu0 0.0
      %155 = vmatpush.msra.mxu0 0.0
      %156 = vmatpush.msra.mxu0 0.0
      %157 = vmatpush.msra.mxu0 0.0
      %158 = vmatpush.msra.mxu0 0.0
      %159 = vmatpush.msra.mxu0 0.0
      %160 = vmatpush.msra.mxu0 0.0
      %161 = vmatpush.msra.mxu0 0.0
      %162 = vmatpush.msra.mxu0 0.0
      %163 = vmatpush.msra.mxu0 %v81
      %164 = vmatpush.msra.mxu0 %v80
      %165 = vmatpush.msra.mxu0 %v79
      %166 = vmatpush.msra.mxu0 %v78
      %167 = vmatmul.f32.gmra.mxu0 %v146
      %v168 = vpop.f32.mrf.mxu0
      %v169 = vadd.f32 %v142, %v168
      %170 = vmatmul.f32.gmra.mxu0 %v149
      %v171 = vpop.f32.mrf.mxu0
      %v172 = vadd.f32 %v142, %v171
      %173 = vdwg.mxu0
      %v174 = vtanh.pop %v169
      %v175 = vtanh.pop %v172
      %v177 = vperm.slane %v83, 0
      %v179 = vmul.f32 %v174, %v177
      %v180 = vmul.f32 %v175, %v177
      %v181 = vsel %vm144, %v179, 0.0
      %182 = vadd.xlane.f32.xlu0 %v181
      %v183 = vpop.xlane.xlu0 %182
      %v184 = vsel %vm144, %v180, 0.0
      %185 = vadd.xlane.f32.xlu0 %v184
      %v186 = vpop.xlane.xlu0 %185
      %v188 = vperm.slane %v84, 0
      %v190 = vadd.f32 %v183, %v188
      %v191 = vadd.f32 %v186, %v188
      %v192 = vxor.u32 %v190, 2147483648
      %v193 = vxor.u32 %v191, 2147483648
      %v194 = vmul.f32 %v192, 1.442695
      %v195 = vpow.pop %v194
      %v196 = vmul.f32 %v193, 1.442695
      %v197 = vpow.pop %v196
      %v198 = vadd.f32 %v195, 1.0
      %v199 = vadd.f32 %v197, 1.0
      %v200 = vrcp.pop %v198
      %v201 = vmul.f32 %v198, %v200
      %v202 = vsub.f32 1.0, %v201
      %v203 = vmul.f32 %v200, %v202
      %v204 = vadd.f32 %v200, %v203
      %vm205 = vweird.f32 %v198
      %vm206 = vweird.f32 %v200
      %vm207 = vmor %vm205, %vm206
      %v208 = vsel %vm207, %v200, %v204
      %v209 = vand.u32 2147483647, %v198
      %vm210 = vcmp.eq.f32.partialorder %v209, 8.507059e+37
      %v211 = vand.u32 %v198, 2147483648
      %v212 = vor.u32 1.1754944e-38, %v211
      %v213 = vsel %vm210, %v212, %v208
      %v214 = vmul.f32 1.0, %v213
      %v215 = vrcp.pop %v199
      %v216 = vmul.f32 %v199, %v215
      %v217 = vsub.f32 1.0, %v216
      %v218 = vmul.f32 %v215, %v217
      %v219 = vadd.f32 %v215, %v218
      %vm220 = vweird.f32 %v199
      %vm221 = vweird.f32 %v215
      %vm222 = vmor %vm220, %vm221
      %v223 = vsel %vm222, %v215, %v219
      %v224 = vand.u32 2147483647, %v199
      %vm225 = vcmp.eq.f32.partialorder %v224, 8.507059e+37
      %v226 = vand.u32 %v199, 2147483648
      %v227 = vor.u32 1.1754944e-38, %v226
      %v228 = vsel %vm225, %v227, %v223
      %v229 = vmul.f32 1.0, %v228
      %v230 = vstv %s65
      %v231 = vmul.f32 %v214, %v230
      %v232 = vmul.f32 %v229, %v230
      %v233 = vrot.slane %v102, 7
      %v234 = vrot.slane %v103, 7
      %vm235 = vcmp.lt.s32.totalorder %v86, 1
      %v236 = vsel %vm235, %v233, %v234
      %v237 = vsel %vm235, %v234, %v233
      %v238 = vrot.slane %v102, 1
      %v239 = vrot.slane %v103, 1
      %vm240 = vcmp.lt.s32.totalorder %v86, 7
      %v241 = vsel %vm240, %v238, %v239
      %v242 = vsel %vm240, %v239, %v238
      %v243 = vstv %s61
      %v244 = vsel %vm90, %v243, %v237
      %v245 = vsel %vm91, %v243, %v236
      %v246 = vstv %s62
      %v247 = vsel %vm90, %v246, %v237
      %v248 = vsel %vm91, %v246, %v236
      %s249 = smul.f32 %s59, %s66
      %v250 = vsub.f32 %v237, %v102
      %v251 = vsub.f32 %v236, %v103
      %v252 = vstv %s249
      %v253 = vmul.f32 %v252, %v250
      %v254 = vmul.f32 %v252, %v251
      %v255 = vsel %vm92, %v253, %v241
      %v256 = vsel %vm93, %v254, %v242
      %v257 = vstv %s59
      %v258 = vmul.f32 %v257, %v231
      %v259 = vmul.f32 %v257, %v232
      %v260 = vstv %s63
      %v261 = vmul.f32 %v260, %v102
      %v262 = vmul.f32 %v260, %v103
      %v263 = vstv %s64
      %v264 = vmul.f32 %v263, %v244
      %v265 = vmul.f32 %v263, %v245
      %v266 = vadd.f32 %v261, %v264
      %v267 = vadd.f32 %v262, %v265
      %v268 = vmul.f32 %v258, %v266
      %v269 = vmul.f32 %v259, %v267
      %v270 = vmul.f32 %v263, %v255
      %v271 = vmul.f32 %v263, %v256
      %v272 = vadd.f32 %v261, %v270
      %v273 = vadd.f32 %v262, %v271
      %v274 = vmul.f32 %v258, %v272
      %v275 = vmul.f32 %v259, %v273
      %v276 = vadd.f32 %v268, %v274
      %v277 = vadd.f32 %v269, %v275
      %v278 = vmul.f32 %v263, %v247
      %v279 = vmul.f32 %v263, %v248
      %v280 = vadd.f32 %v261, %v278
      %v281 = vadd.f32 %v262, %v279
      %v282 = vstv %s60
      %v283 = vmul.f32 %v282, %v280
      %v284 = vmul.f32 %v282, %v281
      %v285 = vmul.f32 %v282, %v272
      %v286 = vmul.f32 %v282, %v273
      %v287 = vadd.f32 %v283, %v285
      %v288 = vadd.f32 %v284, %v286
      %vm289 = vcmp.eq.s32.totalorder %v89, 0
      %291 = vset.pattern.permute.xlu0 0
      %292 = vperm.xlu0 %291, %v276
      %v293 = vpop.permute.xlu0 %292
      %296 = vset.pattern.permute.xlu0 0
      %297 = vperm.xlu0 %296, %v277
      %v298 = vpop.permute.xlu0 %297
      %301 = vset.pattern.permute.xlu0 0
      %302 = vperm.xlu0 %301, %v287
      %v303 = vpop.permute.xlu0 %302
      %306 = vset.pattern.permute.xlu0 0
      %307 = vperm.xlu0 %306, %v288
      %v308 = vpop.permute.xlu0 %307
      %v310 = vsel %vm289, %v293, %v303
      %v311 = vsel %vm289, %v298, %v308
      %v312 = vstv %s114
      %v313 = vmul.f32 %v312, %v310
      %v314 = vmul.f32 %v312, %v311
      %v315 = vadd.f32 %v102, %v313
      %v316 = vadd.f32 %v103, %v314
      %318 = vset.pattern.permute.xlu0 0
      %319 = vperm.xlu0 %318, %v315
      %v320 = vpop.permute.xlu0 %319
      %323 = vset.pattern.permute.xlu0 0
      %324 = vperm.xlu0 %323, %v316
      %v325 = vpop.permute.xlu0 %324
      %v327 = vmul.f32 %v320, %v130
      %v328 = vmul.f32 %v325, %v130
      %v329 = vadd.f32 %v327, %v135
      %v330 = vadd.f32 %v328, %v135
      %v331 = vtanh.pop %v329
      %v332 = vtanh.pop %v330
      %v334 = vsel %vm144, %v331, 0
      %v337 = vsel %vm144, %v332, 0
      %339 = vmatpush.msra.mxu0 0.0
      %340 = vmatpush.msra.mxu0 0.0
      %341 = vmatpush.msra.mxu0 0.0
      %342 = vmatpush.msra.mxu0 0.0
      %343 = vmatpush.msra.mxu0 0.0
      %344 = vmatpush.msra.mxu0 0.0
      %345 = vmatpush.msra.mxu0 0.0
      %346 = vmatpush.msra.mxu0 0.0
      %347 = vmatpush.msra.mxu0 0.0
      %348 = vmatpush.msra.mxu0 0.0
      %349 = vmatpush.msra.mxu0 0.0
      %350 = vmatpush.msra.mxu0 0.0
      %351 = vmatpush.msra.mxu0 %v81
      %352 = vmatpush.msra.mxu0 %v80
      %353 = vmatpush.msra.mxu0 %v79
      %354 = vmatpush.msra.mxu0 %v78
      %355 = vmatmul.f32.gmra.mxu0 %v334
      %v356 = vpop.f32.mrf.mxu0
      %v357 = vadd.f32 %v142, %v356
      %358 = vmatmul.f32.gmra.mxu0 %v337
      %v359 = vpop.f32.mrf.mxu0
      %v360 = vadd.f32 %v142, %v359
      %361 = vdwg.mxu0
      %v362 = vtanh.pop %v357
      %v363 = vtanh.pop %v360
      %v364 = vmul.f32 %v362, %v177
      %v365 = vmul.f32 %v363, %v177
      %v366 = vsel %vm144, %v364, 0.0
      %367 = vadd.xlane.f32.xlu0 %v366
      %v368 = vpop.xlane.xlu0 %367
      %v369 = vsel %vm144, %v365, 0.0
      %370 = vadd.xlane.f32.xlu0 %v369
      %v371 = vpop.xlane.xlu0 %370
      %v372 = vadd.f32 %v368, %v188
      %v373 = vadd.f32 %v371, %v188
      %v374 = vxor.u32 %v372, 2147483648
      %v375 = vxor.u32 %v373, 2147483648
      %v376 = vmul.f32 %v374, 1.442695
      %v377 = vpow.pop %v376
      %v378 = vmul.f32 %v375, 1.442695
      %v379 = vpow.pop %v378
      %v380 = vadd.f32 %v377, 1.0
      %v381 = vadd.f32 %v379, 1.0
      %v382 = vrcp.pop %v380
      %v383 = vmul.f32 %v380, %v382
      %v384 = vsub.f32 1.0, %v383
      %v385 = vmul.f32 %v382, %v384
      %v386 = vadd.f32 %v382, %v385
      %vm387 = vweird.f32 %v380
      %vm388 = vweird.f32 %v382
      %vm389 = vmor %vm387, %vm388
      %v390 = vsel %vm389, %v382, %v386
      %v391 = vand.u32 2147483647, %v380
      %vm392 = vcmp.eq.f32.partialorder %v391, 8.507059e+37
      %v393 = vand.u32 %v380, 2147483648
      %v394 = vor.u32 1.1754944e-38, %v393
      %v395 = vsel %vm392, %v394, %v390
      %v396 = vmul.f32 1.0, %v395
      %v397 = vrcp.pop %v381
      %v398 = vmul.f32 %v381, %v397
      %v399 = vsub.f32 1.0, %v398
      %v400 = vmul.f32 %v397, %v399
      %v401 = vadd.f32 %v397, %v400
      %vm402 = vweird.f32 %v381
      %vm403 = vweird.f32 %v397
      %vm404 = vmor %vm402, %vm403
      %v405 = vsel %vm404, %v397, %v401
      %v406 = vand.u32 2147483647, %v381
      %vm407 = vcmp.eq.f32.partialorder %v406, 8.507059e+37
      %v408 = vand.u32 %v381, 2147483648
      %v409 = vor.u32 1.1754944e-38, %v408
      %v410 = vsel %vm407, %v409, %v405
      %v411 = vmul.f32 1.0, %v410
      %v412 = vmul.f32 %v396, %v230
      %v413 = vmul.f32 %v411, %v230
      %v414 = vrot.slane %v315, 7
      %v415 = vrot.slane %v316, 7
      %v416 = vsel %vm235, %v414, %v415
      %v417 = vsel %vm235, %v415, %v414
      %v418 = vrot.slane %v315, 1
      %v419 = vrot.slane %v316, 1
      %v420 = vsel %vm240, %v418, %v419
      %v421 = vsel %vm240, %v419, %v418
      %v422 = vsel %vm90, %v243, %v417
      %v423 = vsel %vm91, %v243, %v416
      %v424 = vsel %vm90, %v246, %v417
      %v425 = vsel %vm91, %v246, %v416
      %v426 = vsub.f32 %v417, %v315
      %v427 = vsub.f32 %v416, %v316
      %v428 = vmul.f32 %v252, %v426
      %v429 = vmul.f32 %v252, %v427
      %v430 = vsel %vm92, %v428, %v420
      %v431 = vsel %vm93, %v429, %v421
      %v432 = vmul.f32 %v257, %v412
      %v433 = vmul.f32 %v257, %v413
      %v434 = vmul.f32 %v260, %v315
      %v435 = vmul.f32 %v260, %v316
      %v436 = vmul.f32 %v263, %v422
      %v437 = vmul.f32 %v263, %v423
      %v438 = vadd.f32 %v434, %v436
      %v439 = vadd.f32 %v435, %v437
      %v440 = vmul.f32 %v432, %v438
      %v441 = vmul.f32 %v433, %v439
      %v442 = vmul.f32 %v263, %v430
      %v443 = vmul.f32 %v263, %v431
      %v444 = vadd.f32 %v434, %v442
      %v445 = vadd.f32 %v435, %v443
      %v446 = vmul.f32 %v432, %v444
      %v447 = vmul.f32 %v433, %v445
      %v448 = vadd.f32 %v440, %v446
      %v449 = vadd.f32 %v441, %v447
      %v450 = vmul.f32 %v263, %v424
      %v451 = vmul.f32 %v263, %v425
      %v452 = vadd.f32 %v434, %v450
      %v453 = vadd.f32 %v435, %v451
      %v454 = vmul.f32 %v282, %v452
      %v455 = vmul.f32 %v282, %v453
      %v456 = vmul.f32 %v282, %v444
      %v457 = vmul.f32 %v282, %v445
      %v458 = vadd.f32 %v454, %v456
      %v459 = vadd.f32 %v455, %v457
      %461 = vset.pattern.permute.xlu0 0
      %462 = vperm.xlu0 %461, %v448
      %v463 = vpop.permute.xlu0 %462
      %466 = vset.pattern.permute.xlu0 0
      %467 = vperm.xlu0 %466, %v449
      %v468 = vpop.permute.xlu0 %467
      %471 = vset.pattern.permute.xlu0 0
      %472 = vperm.xlu0 %471, %v458
      %v473 = vpop.permute.xlu0 %472
      %476 = vset.pattern.permute.xlu0 0
      %477 = vperm.xlu0 %476, %v459
      %v478 = vpop.permute.xlu0 %477
      %v480 = vsel %vm289, %v463, %v473
      %v481 = vsel %vm289, %v468, %v478
      %v482 = vmul.f32 %v312, %v480
      %v483 = vmul.f32 %v312, %v481
      %v484 = vadd.f32 %v102, %v482
      %v485 = vadd.f32 %v103, %v483
      %487 = vset.pattern.permute.xlu0 0
      %488 = vperm.xlu0 %487, %v484
      %v489 = vpop.permute.xlu0 %488
      %492 = vset.pattern.permute.xlu0 0
      %493 = vperm.xlu0 %492, %v485
      %v494 = vpop.permute.xlu0 %493
      %v496 = vmul.f32 %v489, %v130
      %v497 = vmul.f32 %v494, %v130
      %v498 = vadd.f32 %v496, %v135
      %v499 = vadd.f32 %v497, %v135
      %v500 = vtanh.pop %v498
      %v501 = vtanh.pop %v499
      %v503 = vsel %vm144, %v500, 0
      %v506 = vsel %vm144, %v501, 0
      %508 = vmatpush.msra.mxu0 0.0
      %509 = vmatpush.msra.mxu0 0.0
      %510 = vmatpush.msra.mxu0 0.0
      %511 = vmatpush.msra.mxu0 0.0
      %512 = vmatpush.msra.mxu0 0.0
      %513 = vmatpush.msra.mxu0 0.0
      %514 = vmatpush.msra.mxu0 0.0
      %515 = vmatpush.msra.mxu0 0.0
      %516 = vmatpush.msra.mxu0 0.0
      %517 = vmatpush.msra.mxu0 0.0
      %518 = vmatpush.msra.mxu0 0.0
      %519 = vmatpush.msra.mxu0 0.0
      %520 = vmatpush.msra.mxu0 %v81
      %521 = vmatpush.msra.mxu0 %v80
      %522 = vmatpush.msra.mxu0 %v79
      %523 = vmatpush.msra.mxu0 %v78
      %524 = vmatmul.f32.gmra.mxu0 %v503
      %v525 = vpop.f32.mrf.mxu0
      %v526 = vadd.f32 %v142, %v525
      %527 = vmatmul.f32.gmra.mxu0 %v506
      %v528 = vpop.f32.mrf.mxu0
      %v529 = vadd.f32 %v142, %v528
      %530 = vdwg.mxu0
      %v531 = vtanh.pop %v526
      %v532 = vtanh.pop %v529
      %v533 = vmul.f32 %v531, %v177
      %v534 = vmul.f32 %v532, %v177
      %v535 = vsel %vm144, %v533, 0.0
      %536 = vadd.xlane.f32.xlu0 %v535
      %v537 = vpop.xlane.xlu0 %536
      %v538 = vsel %vm144, %v534, 0.0
      %539 = vadd.xlane.f32.xlu0 %v538
      %v540 = vpop.xlane.xlu0 %539
      %v541 = vadd.f32 %v537, %v188
      %v542 = vadd.f32 %v540, %v188
      %v543 = vxor.u32 %v541, 2147483648
      %v544 = vxor.u32 %v542, 2147483648
      %v545 = vmul.f32 %v543, 1.442695
      %v546 = vpow.pop %v545
      %v547 = vmul.f32 %v544, 1.442695
      %v548 = vpow.pop %v547
      %v549 = vadd.f32 %v546, 1.0
      %v550 = vadd.f32 %v548, 1.0
      %v551 = vrcp.pop %v549
      %v552 = vmul.f32 %v549, %v551
      %v553 = vsub.f32 1.0, %v552
      %v554 = vmul.f32 %v551, %v553
      %v555 = vadd.f32 %v551, %v554
      %vm556 = vweird.f32 %v549
      %vm557 = vweird.f32 %v551
      %vm558 = vmor %vm556, %vm557
      %v559 = vsel %vm558, %v551, %v555
      %v560 = vand.u32 2147483647, %v549
      %vm561 = vcmp.eq.f32.partialorder %v560, 8.507059e+37
      %v562 = vand.u32 %v549, 2147483648
      %v563 = vor.u32 1.1754944e-38, %v562
      %v564 = vsel %vm561, %v563, %v559
      %v565 = vmul.f32 1.0, %v564
      %v566 = vrcp.pop %v550
      %v567 = vmul.f32 %v550, %v566
      %v568 = vsub.f32 1.0, %v567
      %v569 = vmul.f32 %v566, %v568
      %v570 = vadd.f32 %v566, %v569
      %vm571 = vweird.f32 %v550
      %vm572 = vweird.f32 %v566
      %vm573 = vmor %vm571, %vm572
      %v574 = vsel %vm573, %v566, %v570
      %v575 = vand.u32 2147483647, %v550
      %vm576 = vcmp.eq.f32.partialorder %v575, 8.507059e+37
      %v577 = vand.u32 %v550, 2147483648
      %v578 = vor.u32 1.1754944e-38, %v577
      %v579 = vsel %vm576, %v578, %v574
      %v580 = vmul.f32 1.0, %v579
      %v581 = vmul.f32 %v565, %v230
      %v582 = vmul.f32 %v580, %v230
      %v583 = vrot.slane %v484, 7
      %v584 = vrot.slane %v485, 7
      %v585 = vsel %vm235, %v583, %v584
      %v586 = vsel %vm235, %v584, %v583
      %v587 = vrot.slane %v484, 1
      %v588 = vrot.slane %v485, 1
      %v589 = vsel %vm240, %v587, %v588
      %v590 = vsel %vm240, %v588, %v587
      %v591 = vsel %vm90, %v243, %v586
      %v592 = vsel %vm91, %v243, %v585
      %v593 = vsel %vm90, %v246, %v586
      %v594 = vsel %vm91, %v246, %v585
      %v595 = vsub.f32 %v586, %v484
      %v596 = vsub.f32 %v585, %v485
      %v597 = vmul.f32 %v252, %v595
      %v598 = vmul.f32 %v252, %v596
      %v599 = vsel %vm92, %v597, %v589
      %v600 = vsel %vm93, %v598, %v590
      %v601 = vmul.f32 %v257, %v581
      %v602 = vmul.f32 %v257, %v582
      %v603 = vmul.f32 %v260, %v484
      %v604 = vmul.f32 %v260, %v485
      %v605 = vmul.f32 %v263, %v591
      %v606 = vmul.f32 %v263, %v592
      %v607 = vadd.f32 %v603, %v605
      %v608 = vadd.f32 %v604, %v606
      %v609 = vmul.f32 %v601, %v607
      %v610 = vmul.f32 %v602, %v608
      %v611 = vmul.f32 %v263, %v599
      %v612 = vmul.f32 %v263, %v600
      %v613 = vadd.f32 %v603, %v611
      %v614 = vadd.f32 %v604, %v612
      %v615 = vmul.f32 %v601, %v613
      %v616 = vmul.f32 %v602, %v614
      %v617 = vadd.f32 %v609, %v615
      %v618 = vadd.f32 %v610, %v616
      %v619 = vmul.f32 %v263, %v593
      %v620 = vmul.f32 %v263, %v594
      %v621 = vadd.f32 %v603, %v619
      %v622 = vadd.f32 %v604, %v620
      %v623 = vmul.f32 %v282, %v621
      %v624 = vmul.f32 %v282, %v622
      %v625 = vmul.f32 %v282, %v613
      %v626 = vmul.f32 %v282, %v614
      %v627 = vadd.f32 %v623, %v625
      %v628 = vadd.f32 %v624, %v626
      %630 = vset.pattern.permute.xlu0 0
      %631 = vperm.xlu0 %630, %v617
      %v632 = vpop.permute.xlu0 %631
      %635 = vset.pattern.permute.xlu0 0
      %636 = vperm.xlu0 %635, %v618
      %v637 = vpop.permute.xlu0 %636
      %640 = vset.pattern.permute.xlu0 0
      %641 = vperm.xlu0 %640, %v627
      %v642 = vpop.permute.xlu0 %641
      %645 = vset.pattern.permute.xlu0 0
      %646 = vperm.xlu0 %645, %v628
      %v647 = vpop.permute.xlu0 %646
      %v649 = vsel %vm289, %v632, %v642
      %v650 = vsel %vm289, %v637, %v647
      %v651 = vstv %s106
      %v652 = vmul.f32 %v651, %v649
      %v653 = vmul.f32 %v651, %v650
      %v654 = vadd.f32 %v102, %v652
      %v655 = vadd.f32 %v103, %v653
      %657 = vset.pattern.permute.xlu0 0
      %658 = vperm.xlu0 %657, %v654
      %v659 = vpop.permute.xlu0 %658
      %662 = vset.pattern.permute.xlu0 0
      %663 = vperm.xlu0 %662, %v655
      %v664 = vpop.permute.xlu0 %663
      %v666 = vmul.f32 %v659, %v130
      %v667 = vmul.f32 %v664, %v130
      %v668 = vadd.f32 %v666, %v135
      %v669 = vadd.f32 %v667, %v135
      %v670 = vtanh.pop %v668
      %v671 = vtanh.pop %v669
      %v673 = vsel %vm144, %v670, 0
      %v676 = vsel %vm144, %v671, 0
      %678 = vmatpush.msra.mxu0 0.0
      %679 = vmatpush.msra.mxu0 0.0
      %680 = vmatpush.msra.mxu0 0.0
      %681 = vmatpush.msra.mxu0 0.0
      %682 = vmatpush.msra.mxu0 0.0
      %683 = vmatpush.msra.mxu0 0.0
      %684 = vmatpush.msra.mxu0 0.0
      %685 = vmatpush.msra.mxu0 0.0
      %686 = vmatpush.msra.mxu0 0.0
      %687 = vmatpush.msra.mxu0 0.0
      %688 = vmatpush.msra.mxu0 0.0
      %689 = vmatpush.msra.mxu0 0.0
      %690 = vmatpush.msra.mxu0 %v81
      %691 = vmatpush.msra.mxu0 %v80
      %692 = vmatpush.msra.mxu0 %v79
      %693 = vmatpush.msra.mxu0 %v78
      %694 = vmatmul.f32.gmra.mxu0 %v673
      %v695 = vpop.f32.mrf.mxu0
      %v696 = vadd.f32 %v142, %v695
      %697 = vmatmul.f32.gmra.mxu0 %v676
      %v698 = vpop.f32.mrf.mxu0
      %v699 = vadd.f32 %v142, %v698
      %700 = vdwg.mxu0
      %v701 = vtanh.pop %v696
      %v702 = vtanh.pop %v699
      %v703 = vmul.f32 %v701, %v177
      %v704 = vmul.f32 %v702, %v177
      %v705 = vsel %vm144, %v703, 0.0
      %706 = vadd.xlane.f32.xlu0 %v705
      %v707 = vpop.xlane.xlu0 %706
      %v708 = vsel %vm144, %v704, 0.0
      %709 = vadd.xlane.f32.xlu0 %v708
      %v710 = vpop.xlane.xlu0 %709
      %v711 = vadd.f32 %v707, %v188
      %v712 = vadd.f32 %v710, %v188
      %v713 = vxor.u32 %v711, 2147483648
      %v714 = vxor.u32 %v712, 2147483648
      %v715 = vmul.f32 %v713, 1.442695
      %v716 = vpow.pop %v715
      %v717 = vmul.f32 %v714, 1.442695
      %v718 = vpow.pop %v717
      %v719 = vadd.f32 %v716, 1.0
      %v720 = vadd.f32 %v718, 1.0
      %v721 = vrcp.pop %v719
      %v722 = vmul.f32 %v719, %v721
      %v723 = vsub.f32 1.0, %v722
      %v724 = vmul.f32 %v721, %v723
      %v725 = vadd.f32 %v721, %v724
      %vm726 = vweird.f32 %v719
      %vm727 = vweird.f32 %v721
      %vm728 = vmor %vm726, %vm727
      %v729 = vsel %vm728, %v721, %v725
      %v730 = vand.u32 2147483647, %v719
      %vm731 = vcmp.eq.f32.partialorder %v730, 8.507059e+37
      %v732 = vand.u32 %v719, 2147483648
      %v733 = vor.u32 1.1754944e-38, %v732
      %v734 = vsel %vm731, %v733, %v729
      %v735 = vmul.f32 1.0, %v734
      %v736 = vrcp.pop %v720
      %v737 = vmul.f32 %v720, %v736
      %v738 = vsub.f32 1.0, %v737
      %v739 = vmul.f32 %v736, %v738
      %v740 = vadd.f32 %v736, %v739
      %vm741 = vweird.f32 %v720
      %vm742 = vweird.f32 %v736
      %vm743 = vmor %vm741, %vm742
      %v744 = vsel %vm743, %v736, %v740
      %v745 = vand.u32 2147483647, %v720
      %vm746 = vcmp.eq.f32.partialorder %v745, 8.507059e+37
      %v747 = vand.u32 %v720, 2147483648
      %v748 = vor.u32 1.1754944e-38, %v747
      %v749 = vsel %vm746, %v748, %v744
      %v750 = vmul.f32 1.0, %v749
      %v751 = vmul.f32 %v735, %v230
      %v752 = vmul.f32 %v750, %v230
      %v753 = vrot.slane %v654, 7
      %v754 = vrot.slane %v655, 7
      %v755 = vsel %vm235, %v753, %v754
      %v756 = vsel %vm235, %v754, %v753
      %v757 = vrot.slane %v654, 1
      %v758 = vrot.slane %v655, 1
      %v759 = vsel %vm240, %v757, %v758
      %v760 = vsel %vm240, %v758, %v757
      %v761 = vsel %vm90, %v243, %v756
      %v762 = vsel %vm91, %v243, %v755
      %v763 = vsel %vm90, %v246, %v756
      %v764 = vsel %vm91, %v246, %v755
      %v765 = vsub.f32 %v756, %v654
      %v766 = vsub.f32 %v755, %v655
      %v767 = vmul.f32 %v252, %v765
      %v768 = vmul.f32 %v252, %v766
      %v769 = vsel %vm92, %v767, %v759
      %v770 = vsel %vm93, %v768, %v760
      %v771 = vmul.f32 %v257, %v751
      %v772 = vmul.f32 %v257, %v752
      %v773 = vmul.f32 %v260, %v654
      %v774 = vmul.f32 %v260, %v655
      %v775 = vmul.f32 %v263, %v761
      %v776 = vmul.f32 %v263, %v762
      %v777 = vadd.f32 %v773, %v775
      %v778 = vadd.f32 %v774, %v776
      %v779 = vmul.f32 %v771, %v777
      %v780 = vmul.f32 %v772, %v778
      %v781 = vmul.f32 %v263, %v769
      %v782 = vmul.f32 %v263, %v770
      %v783 = vadd.f32 %v773, %v781
      %v784 = vadd.f32 %v774, %v782
      %v785 = vmul.f32 %v771, %v783
      %v786 = vmul.f32 %v772, %v784
      %v787 = vadd.f32 %v779, %v785
      %v788 = vadd.f32 %v780, %v786
      %v789 = vmul.f32 %v263, %v763
      %v790 = vmul.f32 %v263, %v764
      %v791 = vadd.f32 %v773, %v789
      %v792 = vadd.f32 %v774, %v790
      %v793 = vmul.f32 %v282, %v791
      %v794 = vmul.f32 %v282, %v792
      %v795 = vmul.f32 %v282, %v783
      %v796 = vmul.f32 %v282, %v784
      %v797 = vadd.f32 %v793, %v795
      %v798 = vadd.f32 %v794, %v796
      %800 = vset.pattern.permute.xlu0 0
      %801 = vperm.xlu0 %800, %v787
      %v802 = vpop.permute.xlu0 %801
      %805 = vset.pattern.permute.xlu0 0
      %806 = vperm.xlu0 %805, %v788
      %v807 = vpop.permute.xlu0 %806
      %810 = vset.pattern.permute.xlu0 0
      %811 = vperm.xlu0 %810, %v797
      %v812 = vpop.permute.xlu0 %811
      %815 = vset.pattern.permute.xlu0 0
      %816 = vperm.xlu0 %815, %v798
      %v817 = vpop.permute.xlu0 %816
      %v819 = vsel %vm289, %v802, %v812
      %v820 = vsel %vm289, %v807, %v817
      %v821 = vmul.f32 %v480, 2.0
      %v822 = vmul.f32 %v481, 2.0
      %v823 = vadd.f32 %v310, %v821
      %v824 = vadd.f32 %v311, %v822
      %v825 = vmul.f32 %v649, 2.0
      %v826 = vmul.f32 %v650, 2.0
      %v827 = vadd.f32 %v823, %v825
      %v828 = vadd.f32 %v824, %v826
      %v829 = vadd.f32 %v827, %v819
      %v830 = vadd.f32 %v828, %v820
      %v831 = vstv %s118
      %v832 = vmul.f32 %v831, %v829
      %v833 = vmul.f32 %v831, %v830
      %v834 = vadd.f32 %v102, %v832
      %v835 = vadd.f32 %v103, %v833
      %s836 = smul.u32 %s97, 16
      %s837 = scalar_lea.vmem [#allocation3], %s836
      %vm838 = vcmask 15360
      %839 = vst.msk [vmem:[%s837] sm:$0xff] %vm838, %v834
      %840 = vst.msk [vmem:[%s837 + $0x8] sm:$0xff] %vm838, %v835
    $region42: #{forward.1} parent=1 // loop_footer
      %s101 = sadd.s32 1, %s97
    $region43: #{forward.1} parent=1 // loop_footer_branch
      %96 = sbr.rel target = $region39
    $region44: #{forward.1} parent=1 // loop_exit
      _
    %vm841 = vcmask 15360
    %842 = vst.msk [vmem:[#allocation2] sm:$0xff] %vm841, %v102
    %843 = vst.msk [vmem:[#allocation2 + $0x8] sm:$0xff] %vm841, %v103
    %v844 = vld [vmem:[#allocation3] sm:$0xff]
    %v845 = vld [vmem:[#allocation3 + $0x8] sm:$0xff]
    %v846 = vld [vmem:[#allocation3 + $0x10] sm:$0xff]
    %v847 = vld [vmem:[#allocation3 + $0x18] sm:$0xff]
    %v848 = vld [vmem:[#allocation3 + $0x20] sm:$0xff]
    %v849 = vld [vmem:[#allocation3 + $0x28] sm:$0xff]
    %v850 = vld [vmem:[#allocation3 + $0x30] sm:$0xff]
    %v851 = vld [vmem:[#allocation3 + $0x38] sm:$0xff]
    %v852 = vld [vmem:[#allocation3 + $0x40] sm:$0xff]
    %v853 = vld [vmem:[#allocation3 + $0x48] sm:$0xff]
    %v854 = vld [vmem:[#allocation3 + $0x50] sm:$0xff]
    %v855 = vld [vmem:[#allocation3 + $0x58] sm:$0xff]
    %v856 = vld [vmem:[#allocation3 + $0x60] sm:$0xff]
    %v857 = vld [vmem:[#allocation3 + $0x68] sm:$0xff]
    %858 = vst.msk [vmem:[%s9] sm:$0xff] %vm841, %v844
    %859 = vst.msk [vmem:[%s9 + $0x8] sm:$0xff] %vm841, %v845
    %860 = vst.msk [vmem:[%s9 + $0x10] sm:$0xff] %vm841, %v846
    %861 = vst.msk [vmem:[%s9 + $0x18] sm:$0xff] %vm841, %v847
    %862 = vst.msk [vmem:[%s9 + $0x20] sm:$0xff] %vm841, %v848
    %863 = vst.msk [vmem:[%s9 + $0x28] sm:$0xff] %vm841, %v849
    %864 = vst.msk [vmem:[%s9 + $0x30] sm:$0xff] %vm841, %v850
    %865 = vst.msk [vmem:[%s9 + $0x38] sm:$0xff] %vm841, %v851
    %866 = vst.msk [vmem:[%s9 + $0x40] sm:$0xff] %vm841, %v852
    %867 = vst.msk [vmem:[%s9 + $0x48] sm:$0xff] %vm841, %v853
    %868 = vst.msk [vmem:[%s9 + $0x50] sm:$0xff] %vm841, %v854
    %869 = vst.msk [vmem:[%s9 + $0x58] sm:$0xff] %vm841, %v855
    %870 = vst.msk [vmem:[%s9 + $0x60] sm:$0xff] %vm841, %v856
    %871 = vst.msk [vmem:[%s9 + $0x68] sm:$0xff] %vm841, %v857
    // Predicated region
    $region45: #{forward.1} parent=1 // pred_check
      _
    $region46: #{forward.1} parent=1 // pred_check_branch
      %873 = sbr.rel (0) target = $region48
    $region47: #{forward.1} parent=1 // pred_region
      _
    $region48: #{forward.1} parent=1 // pred_fallthru
      _
    // Predicated region
    $region49: #{forward.1} parent=1 // pred_check
      _
    $region50: #{forward.1} parent=1 // pred_check_branch
      %875 = sbr.rel (0) target = $region52
    $region51: #{forward.1} parent=1 // pred_region
      _
    $region52: #{forward.1} parent=1 // pred_fallthru
      _
    %876 = vsyncpa [#allocation9], 1

</llo_original>
